<compile_context>
chip_gen: v7x
topology: tpu7x:2x2x1
jax: 0.10.0
libtpu: 0.0.40
codegen_flags: <defaults>
</compile_context>

<pallas_src>
import functools

import jax
import jax.numpy as jnp
from jax import lax
from jax.experimental import pallas as pl
from jax.experimental.pallas import tpu as pltpu


def _round_up(x, m):
    return ((x + m - 1) // m) * m


def _pad2(a, rows, cols):
    return jnp.pad(a, ((0, rows - a.shape[0]), (0, cols - a.shape[1])))


# --------------------------------------------------------------------------
# Edge kernel: edge MLP + scatter-sum aggregation (one-hot matmul on MXU)
# --------------------------------------------------------------------------
def _edge_kernel(row_ref, src_ref, tgt_ref, pre_ref,
                 w1s_ref, w1t_ref, w2_ref, b2_ref,
                 edge_out_ref, agg_ref, *, compute_dtype):
    # Zero the resident aggregation accumulator on the first edge block.
    @pl.when(pl.program_id(0) == 0)
    def _():
        agg_ref[...] = jnp.zeros_like(agg_ref)

    # concat([src, tgt, ea], 1) @ W1 + b1
    #   == src @ W1s + tgt @ W1t + (ea @ W1e + b1)   (last term precomputed,
    #      its contraction dim is tiny so it is folded in the wrapper).
    h = (jnp.dot(src_ref[...], w1s_ref[...], preferred_element_type=jnp.float32)
         + jnp.dot(tgt_ref[...], w1t_ref[...], preferred_element_type=jnp.float32)
         + pre_ref[...])
    h = jnp.maximum(h, 0.0)
    h = jnp.dot(h.astype(compute_dtype), w2_ref[...],
                preferred_element_type=jnp.float32) + b2_ref[...]
    h = jnp.maximum(h, 0.0)
    edge_out_ref[...] = h

    # segment_sum(edge_feat, row): one_hot[n, e] = (row[e] == n),
    # agg += one_hot @ edge_feat   (plain [N, TE] @ [TE, H] on the MXU,
    # accumulated in f32; padded edges carry an out-of-range row id).
    n_nodes = agg_ref.shape[0]
    te = row_ref.shape[1]
    node_iota = lax.broadcasted_iota(jnp.int32, (n_nodes, te), 0)
    one_hot = (node_iota == row_ref[...]).astype(compute_dtype)       # (N, TE)
    agg_ref[...] += jnp.dot(one_hot, h.astype(compute_dtype),
                            preferred_element_type=jnp.float32)


# --------------------------------------------------------------------------
# Node kernel: node MLP with residual (recurrent) connection, node-tiled
# --------------------------------------------------------------------------
def _node_kernel(x_ref, agg_ref, w1h_ref, w1a_ref, b1_ref, w2_ref, b2_ref,
                 out_ref, *, compute_dtype):
    x = x_ref[...]                                                    # f32
    # concat([h, agg], 1) @ NW1 == h @ W1h + agg @ W1a
    z = (jnp.dot(x.astype(compute_dtype), w1h_ref[...],
                 preferred_element_type=jnp.float32)
         + jnp.dot(agg_ref[...].astype(compute_dtype), w1a_ref[...],
                   preferred_element_type=jnp.float32)
         + b1_ref[...])
    z = jnp.maximum(z, 0.0)
    z = jnp.dot(z.astype(compute_dtype), w2_ref[...],
                preferred_element_type=jnp.float32) + b2_ref[...]
    out_ref[...] = x + z      # recurrent residual stays in f32


def init_params(key, input_nf, hidden_nf, edges_in_nf):
    ks = jax.random.split(key, 8)
    s = 0.1
    return dict(
        e_w1=jax.random.normal(ks[0], (2 * input_nf + edges_in_nf, hidden_nf),
                               jnp.float32) * s,
        e_b1=jax.random.normal(ks[1], (hidden_nf,), jnp.float32) * s,
        e_w2=jax.random.normal(ks[2], (hidden_nf, hidden_nf), jnp.float32) * s,
        e_b2=jax.random.normal(ks[3], (hidden_nf,), jnp.float32) * s,
        n_w1=jax.random.normal(ks[4], (input_nf + hidden_nf, hidden_nf),
                               jnp.float32) * s,
        n_b1=jax.random.normal(ks[5], (hidden_nf,), jnp.float32) * s,
        n_w2=jax.random.normal(ks[6], (hidden_nf, input_nf), jnp.float32) * s,
        n_b2=jax.random.normal(ks[7], (input_nf,), jnp.float32) * s,
    )


def gcl_forward(params, x, edge_index, edge_attr, *,
                edge_tile=256, node_tile=256, compute_dtype=jnp.bfloat16):
    """forward(x, edge_index, edge_attr) -> (x_out, edge_feat)."""
    n_nodes, input_nf = x.shape
    n_edges, _ = edge_attr.shape
    hidden_nf = params["e_w1"].shape[1]
    cdt = jnp.dtype(compute_dtype)
    csz = cdt.itemsize

    # Lane-dense feature dims (multiples of 128); sublane-aligned row tiles.
    f_pad = _round_up(input_nf, 128)
    h_pad = _round_up(hidden_nf, 128)
    edge_tile = min(edge_tile, _round_up(n_edges, 8))
    node_tile = min(node_tile, _round_up(n_nodes, 8))
    e_pad = _round_up(n_edges, edge_tile)
    n_pad = _round_up(n_nodes, node_tile)

    row = edge_index[0].astype(jnp.int32)
    col = edge_index[1].astype(jnp.int32)
    x32 = x.astype(jnp.float32)

    # Gather per-edge endpoint features in the wrapper.
    # TODO(synk): do the x[row]/x[col] gather in-kernel (scalar-prefetched
    #             row/col + manual DMA) to cut the extra 2*E*F HBM traffic.
    src = jnp.take(x32, row, axis=0)
    tgt = jnp.take(x32, col, axis=0)
    src_p = _pad2(src, e_pad, f_pad).astype(cdt)
    tgt_p = _pad2(tgt, e_pad, f_pad).astype(cdt)

    # Padded edges get an out-of-range receiver id -> scatter ignores them.
    row_p = jnp.pad(row, (0, e_pad - n_edges),
                    constant_values=n_pad).reshape(1, e_pad)

    # Split concat-weights; fold the tiny-K edge-attr matmul (+ b1) into a
    # precomputed additive per-edge term (kept in f32).
    e_w1s = _pad2(params["e_w1"][:input_nf], f_pad, h_pad).astype(cdt)
    e_w1t = _pad2(params["e_w1"][input_nf:2 * input_nf], f_pad, h_pad).astype(cdt)
    e_w1e = params["e_w1"][2 * input_nf:]
    pre = edge_attr.astype(jnp.float32) @ e_w1e + params["e_b1"][None, :]
    pre_p = _pad2(pre, e_pad, h_pad)
    e_w2 = _pad2(params["e_w2"], h_pad, h_pad).astype(cdt)
    e_b2 = _pad2(params["e_b2"].reshape(1, hidden_nf), 1, h_pad)

    full = lambda i: (0, 0)
    rows_blk = lambda i: (i, 0)
    cols_blk = lambda i: (0, i)

    edge_block_bytes = (
        edge_tile * 4                              # row ids
        + 2 * edge_tile * f_pad * csz              # src, tgt
        + edge_tile * h_pad * 4                    # pre
        + 2 * f_pad * h_pad * csz                  # W1s, W1t
        + h_pad * h_pad * csz + h_pad * 4          # W2, b2
        + edge_tile * h_pad * 4                    # edge_out
        + n_pad * h_pad * 4)                       # resident agg
    edge_vmem = max(2 * edge_block_bytes + (2 << 20), 32 << 20)

    edge_feat_p, agg_p = pl.pallas_call(
        functools.partial(_edge_kernel, compute_dtype=cdt),
        out_shape=(
            jax.ShapeDtypeStruct((e_pad, h_pad), jnp.float32),
            jax.ShapeDtypeStruct((n_pad, h_pad), jnp.float32),
        ),
        grid_spec=pltpu.PrefetchScalarGridSpec(
            num_scalar_prefetch=0,
            grid=(e_pad // edge_tile,),
            in_specs=[
                pl.BlockSpec((1, edge_tile), cols_blk),        # row ids
                pl.BlockSpec((edge_tile, f_pad), rows_blk),    # src feats
                pl.BlockSpec((edge_tile, f_pad), rows_blk),    # tgt feats
                pl.BlockSpec((edge_tile, h_pad), rows_blk),    # ea@W1e + b1
                pl.BlockSpec((f_pad, h_pad), full),            # W1 (src part)
                pl.BlockSpec((f_pad, h_pad), full),            # W1 (tgt part)
                pl.BlockSpec((h_pad, h_pad), full),            # W2
                pl.BlockSpec((1, h_pad), full),                # b2
            ],
            out_specs=[
                pl.BlockSpec((edge_tile, h_pad), rows_blk),    # edge_feat
                pl.BlockSpec((n_pad, h_pad), full),            # agg (resident)
            ],
        ),
        compiler_params=pltpu.CompilerParams(
            dimension_semantics=("arbitrary",),
            vmem_limit_bytes=edge_vmem),
    )(row_p, src_p, tgt_p, pre_p, e_w1s, e_w1t, e_w2, e_b2)

    # ---- node MLP (tiled over the node axis, parallel) ----
    x_p = _pad2(x32, n_pad, f_pad)
    n_w1h = _pad2(params["n_w1"][:input_nf], f_pad, h_pad).astype(cdt)
    n_w1a = _pad2(params["n_w1"][input_nf:], h_pad, h_pad).astype(cdt)
    n_b1 = _pad2(params["n_b1"].reshape(1, hidden_nf), 1, h_pad)
    n_w2 = _pad2(params["n_w2"], h_pad, f_pad).astype(cdt)
    n_b2 = _pad2(params["n_b2"].reshape(1, input_nf), 1, f_pad)

    node_block_bytes = (
        node_tile * f_pad * 4 + node_tile * h_pad * 4          # x, agg
        + f_pad * h_pad * csz + h_pad * h_pad * csz            # W1h, W1a
        + h_pad * 4 + h_pad * f_pad * csz + f_pad * 4          # b1, W2, b2
        + node_tile * f_pad * 4)                               # out
    node_vmem = max(2 * node_block_bytes + (2 << 20), 32 << 20)

    x_out_p = pl.pallas_call(
        functools.partial(_node_kernel, compute_dtype=cdt),
        out_shape=jax.ShapeDtypeStruct((n_pad, f_pad), jnp.float32),
        grid_spec=pltpu.PrefetchScalarGridSpec(
            num_scalar_prefetch=0,
            grid=(n_pad // node_tile,),
            in_specs=[
                pl.BlockSpec((node_tile, f_pad), rows_blk),    # x
                pl.BlockSpec((node_tile, h_pad), rows_blk),    # agg
                pl.BlockSpec((f_pad, h_pad), full),            # W1 (h part)
                pl.BlockSpec((h_pad, h_pad), full),            # W1 (agg part)
                pl.BlockSpec((1, h_pad), full),                # b1
                pl.BlockSpec((h_pad, f_pad), full),            # W2
                pl.BlockSpec((1, f_pad), full),                # b2
            ],
            out_specs=pl.BlockSpec((node_tile, f_pad), rows_blk),
        ),
        compiler_params=pltpu.CompilerParams(
            dimension_semantics=("parallel",),
            vmem_limit_bytes=node_vmem),
    )(x_p, agg_p, n_w1h, n_w1a, n_b1, n_w2, n_b2)

    return x_out_p[:n_nodes, :input_nf], edge_feat_p[:n_edges, :hidden_nf]


def gcl_reference(params, x, edge_index, edge_attr):
    """Pure-JAX f32 reference for correctness checking."""
    row, col = edge_index[0], edge_index[1]
    src, tgt = x[row], x[col]
    e_in = jnp.concatenate([src, tgt, edge_attr], axis=1)
    h = jax.nn.relu(e_in @ params["e_w1"] + params["e_b1"])
    edge_feat = jax.nn.relu(h @ params["e_w2"] + params["e_b2"])
    agg = jax.ops.segment_sum(edge_feat, row, num_segments=x.shape[0])
    n_in = jnp.concatenate([x, agg], axis=1)
    z = jax.nn.relu(n_in @ params["n_w1"] + params["n_b1"])
    x_out = x + (z @ params["n_w2"] + params["n_b2"])
    return x_out, edge_feat


if __name__ == "__main__":
    # nodes, node feat, edge-attr feat, edges (E not a tile multiple on purpose)
    N, F, FE, E = 60, 32, 4, 300
    key = jax.random.PRNGKey(0)
    k_x, k_ea, k_row, k_col, k_p = jax.random.split(key, 5)

    x = jax.random.normal(k_x, (N, F), jnp.float32)
    edge_attr = jax.random.normal(k_ea, (E, FE), jnp.float32)
    row = jax.random.randint(k_row, (E,), 0, N, jnp.int32)
    col = jax.random.randint(k_col, (E,), 0, N, jnp.int32)
    edge_index = jnp.stack([row, col], axis=0)

    params = init_params(k_p, F, F, FE)   # input_nf = hidden_nf = 32

    x_ref, ef_ref = gcl_reference(params, x, edge_index, edge_attr)

    # Exact structural check: f32 MXU path.
    x_f32, ef_f32 = gcl_forward(params, x, edge_index, edge_attr,
                                compute_dtype=jnp.float32)
    jax.block_until_ready((x_f32, ef_f32))
    assert jnp.allclose(x_f32, x_ref, atol=1e-4, rtol=1e-4)
    assert jnp.allclose(ef_f32, ef_ref, atol=1e-4, rtol=1e-4)

    # Fast path: bf16 matmuls, f32 accumulation / scatter / residual.
    x_bf, ef_bf = gcl_forward(params, x, edge_index, edge_attr,
                              compute_dtype=jnp.bfloat16)
    jax.block_until_ready((x_bf, ef_bf))
    assert jnp.allclose(x_bf, x_ref, atol=5e-2, rtol=5e-2)
    assert jnp.allclose(ef_bf, ef_ref, atol=5e-2, rtol=5e-2)

    print("KERNEL_OK")
</pallas_src>

<mosaic_0001>
module attributes {stable_mosaic.version = 11 : i64} {
  func.func @_edge_kernel(%arg0: i32, %arg1: memref<1x256xi32, #tpu.memory_space<vmem>>, %arg2: memref<256x128xf32, #tpu.memory_space<vmem>>, %arg3: memref<256x128xf32, #tpu.memory_space<vmem>>, %arg4: memref<256x128xf32, #tpu.memory_space<vmem>>, %arg5: memref<128x128xf32, #tpu.memory_space<vmem>>, %arg6: memref<128x128xf32, #tpu.memory_space<vmem>>, %arg7: memref<128x128xf32, #tpu.memory_space<vmem>>, %arg8: memref<1x128xf32, #tpu.memory_space<vmem>>, %arg9: memref<256x128xf32, #tpu.memory_space<vmem>>, %arg10: memref<64x128xf32, #tpu.memory_space<vmem>>) attributes {dimension_semantics = [#tpu.dimension_semantics<arbitrary>], iteration_bounds = array<i64: 2>, scalar_prefetch = 0 : i64, scratch_operands = 0 : i64, tpu.core_type = #tpu.core_type<tc>, window_params = [{transform_indices = @transform_0, window_bounds = array<i64: 1, 256>}, {transform_indices = @transform_1, window_bounds = array<i64: 256, 128>}, {transform_indices = @transform_2, window_bounds = array<i64: 256, 128>}, {transform_indices = @transform_3, window_bounds = array<i64: 256, 128>}, {pipeline_mode = #tpu.pipeline_mode<synchronous>, transform_indices = @transform_4, window_bounds = array<i64: 128, 128>}, {pipeline_mode = #tpu.pipeline_mode<synchronous>, transform_indices = @transform_5, window_bounds = array<i64: 128, 128>}, {pipeline_mode = #tpu.pipeline_mode<synchronous>, transform_indices = @transform_6, window_bounds = array<i64: 128, 128>}, {pipeline_mode = #tpu.pipeline_mode<synchronous>, transform_indices = @transform_7, window_bounds = array<i64: 1, 128>}, {transform_indices = @transform_8, window_bounds = array<i64: 256, 128>}, {pipeline_mode = #tpu.pipeline_mode<synchronous>, transform_indices = @transform_9, window_bounds = array<i64: 64, 128>}]} {
    %c0_i32 = arith.constant 0 : i32
    %0 = arith.cmpi eq, %arg0, %c0_i32 : i32
    %1 = arith.extui %0 : i1 to i32
    %c0_i32_0 = arith.constant 0 : i32
    %2 = arith.cmpi ne, %1, %c0_i32_0 : i32
    scf.if %2 {
      %cst_27 = arith.constant 0.000000e+00 : f32
      %32 = vector.broadcast %cst_27 : f32 to vector<64x128xf32>
      %c0_28 = arith.constant 0 : index
      %c0_29 = arith.constant 0 : index
      %33 = vector.load %arg10[%c0_28, %c0_29] : memref<64x128xf32, #tpu.memory_space<vmem>>, vector<64x128xf32>
      tpu.vector_store %arg10[%c0_28, %c0_29], %32 {strides = array<i32>} : memref<64x128xf32, #tpu.memory_space<vmem>>, vector<64x128xf32>,
    } else {
    }
    %c0 = arith.constant 0 : index
    %c0_1 = arith.constant 0 : index
    %3 = vector.load %arg2[%c0, %c0_1] : memref<256x128xf32, #tpu.memory_space<vmem>>, vector<256x128xf32>
    %c0_2 = arith.constant 0 : index
    %c0_3 = arith.constant 0 : index
    %4 = vector.load %arg5[%c0_2, %c0_3] : memref<128x128xf32, #tpu.memory_space<vmem>>, vector<128x128xf32>
    %cst = arith.constant dense<0.000000e+00> : vector<256x128xf32>
    %5 = tpu.matmul %3, %4, %cst {dimension_numbers = #tpu.dot_dimension_numbers<[1], [0], [0], [1], [0, 0, 1, 1], [], []>} : vector<256x128xf32>, vector<128x128xf32>, vector<256x128xf32> -> vector<256x128xf32>
    %c0_4 = arith.constant 0 : index
    %c0_5 = arith.constant 0 : index
    %6 = vector.load %arg3[%c0_4, %c0_5] : memref<256x128xf32, #tpu.memory_space<vmem>>, vector<256x128xf32>
    %c0_6 = arith.constant 0 : index
    %c0_7 = arith.constant 0 : index
    %7 = vector.load %arg6[%c0_6, %c0_7] : memref<128x128xf32, #tpu.memory_space<vmem>>, vector<128x128xf32>
    %cst_8 = arith.constant dense<0.000000e+00> : vector<256x128xf32>
    %8 = tpu.matmul %6, %7, %cst_8 {dimension_numbers = #tpu.dot_dimension_numbers<[1], [0], [0], [1], [0, 0, 1, 1], [], []>} : vector<256x128xf32>, vector<128x128xf32>, vector<256x128xf32> -> vector<256x128xf32>
    %9 = arith.addf %5, %8 : vector<256x128xf32>
    %c0_9 = arith.constant 0 : index
    %c0_10 = arith.constant 0 : index
    %10 = vector.load %arg4[%c0_9, %c0_10] : memref<256x128xf32, #tpu.memory_space<vmem>>, vector<256x128xf32>
    %11 = arith.addf %9, %10 : vector<256x128xf32>
    %cst_11 = arith.constant 0.000000e+00 : f32
    %12 = vector.broadcast %cst_11 : f32 to vector<256x128xf32>
    %13 = arith.maximumf %11, %12 : vector<256x128xf32>
    %c0_12 = arith.constant 0 : index
    %c0_13 = arith.constant 0 : index
    %14 = vector.load %arg7[%c0_12, %c0_13] : memref<128x128xf32, #tpu.memory_space<vmem>>, vector<128x128xf32>
    %cst_14 = arith.constant dense<0.000000e+00> : vector<256x128xf32>
    %15 = tpu.matmul %13, %14, %cst_14 {dimension_numbers = #tpu.dot_dimension_numbers<[1], [0], [0], [1], [0, 0, 1, 1], [], []>} : vector<256x128xf32>, vector<128x128xf32>, vector<256x128xf32> -> vector<256x128xf32>
    %c0_15 = arith.constant 0 : index
    %c0_16 = arith.constant 0 : index
    %16 = vector.load %arg8[%c0_15, %c0_16] : memref<1x128xf32, #tpu.memory_space<vmem>>, vector<1x128xf32>
    %17 = vector.broadcast %16 : vector<1x128xf32> to vector<256x128xf32>
    %18 = arith.addf %15, %17 : vector<256x128xf32>
    %cst_17 = arith.constant 0.000000e+00 : f32
    %19 = vector.broadcast %cst_17 : f32 to vector<256x128xf32>
    %20 = arith.maximumf %18, %19 : vector<256x128xf32>
    %c0_18 = arith.constant 0 : index
    %c0_19 = arith.constant 0 : index
    %21 = vector.load %arg9[%c0_18, %c0_19] : memref<256x128xf32, #tpu.memory_space<vmem>>, vector<256x128xf32>
    tpu.vector_store %arg9[%c0_18, %c0_19], %20 {strides = array<i32>} : memref<256x128xf32, #tpu.memory_space<vmem>>, vector<256x128xf32>,
    %22 = tpu.iota {dimensions = array<i32: 0>} : vector<64x256xi32>
    %c0_20 = arith.constant 0 : index
    %c0_21 = arith.constant 0 : index
    %23 = vector.load %arg1[%c0_20, %c0_21] : memref<1x256xi32, #tpu.memory_space<vmem>>, vector<1x256xi32>
    %24 = vector.broadcast %23 : vector<1x256xi32> to vector<64x256xi32>
    %25 = arith.cmpi eq, %22, %24 : vector<64x256xi32>
    %26 = arith.extui %25 : vector<64x256xi1> to vector<64x256xi32>
    %27 = arith.sitofp %26 : vector<64x256xi32> to vector<64x256xf32>
    %c0_22 = arith.constant 0 : index
    %c0_23 = arith.constant 0 : index
    %28 = vector.load %arg10[%c0_22, %c0_23] : memref<64x128xf32, #tpu.memory_space<vmem>>, vector<64x128xf32>
    %cst_24 = arith.constant dense<0.000000e+00> : vector<64x128xf32>
    %29 = tpu.matmul %27, %20, %cst_24 {dimension_numbers = #tpu.dot_dimension_numbers<[1], [0], [0], [1], [0, 0, 1, 1], [], []>} : vector<64x256xf32>, vector<256x128xf32>, vector<64x128xf32> -> vector<64x128xf32>
    %30 = arith.addf %28, %29 : vector<64x128xf32>
    %c0_25 = arith.constant 0 : index
    %c0_26 = arith.constant 0 : index
    %31 = vector.load %arg10[%c0_25, %c0_26] : memref<64x128xf32, #tpu.memory_space<vmem>>, vector<64x128xf32>
    tpu.vector_store %arg10[%c0_25, %c0_26], %30 {strides = array<i32>} : memref<64x128xf32, #tpu.memory_space<vmem>>, vector<64x128xf32>,
    return
  }
  func.func @transform_0(%arg0: i32) -> (i32, i32) {
    %c0_i32 = arith.constant 0 : i32
    %c0_i32_0 = arith.constant 0 : i32
    return %c0_i32, %arg0 : i32, i32
  }
  func.func @transform_1(%arg0: i32) -> (i32, i32) {
    %c0_i32 = arith.constant 0 : i32
    %c0_i32_0 = arith.constant 0 : i32
    return %arg0, %c0_i32 : i32, i32
  }
  func.func @transform_2(%arg0: i32) -> (i32, i32) {
    %c0_i32 = arith.constant 0 : i32
    %c0_i32_0 = arith.constant 0 : i32
    return %arg0, %c0_i32 : i32, i32
  }
  func.func @transform_3(%arg0: i32) -> (i32, i32) {
    %c0_i32 = arith.constant 0 : i32
    %c0_i32_0 = arith.constant 0 : i32
    return %arg0, %c0_i32 : i32, i32
  }
  func.func @transform_4(%arg0: i32) -> (i32, i32) {
    %c0_i32 = arith.constant 0 : i32
    %c0_i32_0 = arith.constant 0 : i32
    %c0_i32_1 = arith.constant 0 : i32
    return %c0_i32, %c0_i32_0 : i32, i32
  }
  func.func @transform_5(%arg0: i32) -> (i32, i32) {
    %c0_i32 = arith.constant 0 : i32
    %c0_i32_0 = arith.constant 0 : i32
    %c0_i32_1 = arith.constant 0 : i32
    return %c0_i32, %c0_i32_0 : i32, i32
  }
  func.func @transform_6(%arg0: i32) -> (i32, i32) {
    %c0_i32 = arith.constant 0 : i32
    %c0_i32_0 = arith.constant 0 : i32
    %c0_i32_1 = arith.constant 0 : i32
    return %c0_i32, %c0_i32_0 : i32, i32
  }
  func.func @transform_7(%arg0: i32) -> (i32, i32) {
    %c0_i32 = arith.constant 0 : i32
    %c0_i32_0 = arith.constant 0 : i32
    %c0_i32_1 = arith.constant 0 : i32
    return %c0_i32, %c0_i32_0 : i32, i32
  }
  func.func @transform_8(%arg0: i32) -> (i32, i32) {
    %c0_i32 = arith.constant 0 : i32
    %c0_i32_0 = arith.constant 0 : i32
    return %arg0, %c0_i32 : i32, i32
  }
  func.func @transform_9(%arg0: i32) -> (i32, i32) {
    %c0_i32 = arith.constant 0 : i32
    %c0_i32_0 = arith.constant 0 : i32
    %c0_i32_1 = arith.constant 0 : i32
    return %c0_i32, %c0_i32_0 : i32, i32
  }
}

</mosaic_0001>

<llo_original>
// kernel: tpu_custom_call.1
$region0: #{tpu_custom_call.1}
  #allocation0 [shape = 'u32[]', space=smem, size = 0x4, offset = 0x4, fixed_abs, tag = 'smem constant byte address 0x4 - core index']
  #allocation1 [shape = 'u32[144,128]{1,0:T(1,128)}', space=vmem, size = 0x12000, scoped, tag = 'internal scratch']
  %s0 = inlined_call_operand.hbm [shape: s32[1,512], index: 0, kind: input, shape index: {}]
  %s1 = inlined_call_operand.hbm [shape: f32[512,128], index: 1, kind: input, shape index: {}]
  %s2 = inlined_call_operand.hbm [shape: f32[512,128], index: 2, kind: input, shape index: {}]
  %s3 = inlined_call_operand.hbm [shape: f32[512,128], index: 3, kind: input, shape index: {}]
  %s4 = inlined_call_operand.hbm [shape: f32[128,128], index: 4, kind: input, shape index: {}]
  %s5 = inlined_call_operand.hbm [shape: f32[128,128], index: 5, kind: input, shape index: {}]
  %s6 = inlined_call_operand.hbm [shape: f32[128,128], index: 6, kind: input, shape index: {}]
  %s7 = inlined_call_operand.vmem [shape: f32[1,128], index: 7, kind: input, shape index: {}]
  %s8 = inlined_call_operand.hbm [shape: f32[512,128], index: 8, kind: output, shape index: {0}]
  %s9 = inlined_call_operand.hbm [shape: f32[64,128], index: 9, kind: output, shape index: {1}]
  %10 = xla_tuple %s8, %s9
  %s11 = sld [smem:[#allocation0]]
  $region105: #{tpu_custom_call.1} parent=0
    _
  %s13 = ssub.s32 1, %s11
  %s14 = scalar_select 0, %s13, %s11
  $region1: #{tpu_custom_call.1} parent=0
    #allocation2 [shape = 'u8[2048]{0}', space=vmem, size = 0x800, scoped, tag = 'input window, operand 0']
    #allocation3 [shape = 's32[2]{0}', space=sflag, size = 0x8, scoped, tag = 'scoped memory for tpu_custom_call.1']
    #allocation4 [shape = 's32[2]{0}', space=sflag, size = 0x8, scoped, tag = 'scoped memory for tpu_custom_call.1']
    #allocation5 [shape = 'u8[262144]{0}', space=vmem, size = 0x40000, scoped, tag = 'input window, operand 1']
    #allocation6 [shape = 's32[2]{0}', space=sflag, size = 0x8, scoped, tag = 'scoped memory for tpu_custom_call.1']
    #allocation7 [shape = 'u8[262144]{0}', space=vmem, size = 0x40000, scoped, tag = 'input window, operand 2']
    #allocation8 [shape = 'u8[262144]{0}', space=vmem, size = 0x40000, scoped, tag = 'input window, operand 3']
    #allocation9 [shape = 's32[2]{0}', space=sflag, size = 0x8, scoped, tag = 'scoped memory for tpu_custom_call.1']
    #allocation10 [shape = 'u8[65536]{0}', space=vmem, size = 0x10000, scoped, tag = 'input window, operand 4, single buffered']
    #allocation11 [shape = 'u8[65536]{0}', space=vmem, size = 0x10000, scoped, tag = 'input window, operand 5, single buffered']
    #allocation12 [shape = 's32[1]{0}', space=sflag, size = 0x4, scoped, tag = 'scoped memory for tpu_custom_call.1']
    #allocation13 [shape = 'u8[65536]{0}', space=vmem, size = 0x10000, scoped, tag = 'input window, operand 6, single buffered']
    #allocation14 [shape = 'u8[262144]{0}', space=vmem, size = 0x40000, scoped, tag = 'output window, operand 0']
    #allocation15 [shape = 'u8[32768]{0}', space=vmem, size = 0x8000, scoped, tag = 'output window, operand 1, single buffered']
    #allocation16 [shape = 's32[1]{0}', space=sflag, size = 0x4, scoped, tag = 'scoped memory for tpu_custom_call.1']
    %15 = vsyncpa [#allocation3], 0
    %s16 = scalar_lea.sflag [#allocation3], 1
    %17 = vsyncpa %s16, 0
    %18 = vsyncpa [#allocation6], 0
    %s19 = scalar_lea.sflag [#allocation6], 1
    %20 = vsyncpa %s19, 0
    %21 = vsyncpa [#allocation9], 0
    %s22 = scalar_lea.sflag [#allocation9], 1
    %23 = vsyncpa %s22, 0
    %24 = vsyncpa [#allocation12], 0
    %25 = vsyncpa [#allocation4], 0
    %s26 = scalar_lea.sflag [#allocation4], 1
    %27 = vsyncpa %s26, 0
    %28 = vsyncpa [#allocation16], 0
    loop: start=0, step=1, limit=4
    $region2: #{tpu_custom_call.1} parent=1 // loop_pre_header
      _
    $region3: #{tpu_custom_call.1} parent=1 // loop_header
      %s30 = sphi 0, %s34
      %p31 = scmp.ge.s32.totalorder %s30, 4
      %s40 = sphi 0, %s42
      %s43 = sphi 0, %s40
      %s44 = sphi 0, %s43
      %s60 = sphi 0, %s44
      %s66 = sphi 0, %s68
      %s69 = sphi 0, %s66
      %s70 = sphi 0, %s69
      %s86 = sphi 0, %s70
      %s92 = sphi 0, %s94
      %s95 = sphi 0, %s92
      %s96 = sphi 0, %s95
      %s112 = sphi 0, %s96
      %s118 = sphi 0, %s120
      %s121 = sphi 0, %s118
      %s122 = sphi 0, %s121
      %s138 = sphi 0, %s122
      %s142 = sphi 0, %s142
      %s144 = sphi 0, %s142
      %s145 = sphi 0, %s144
      %s159 = sphi 0, %s145
      %s163 = sphi 0, %s163
      %s165 = sphi 0, %s163
      %s166 = sphi 0, %s165
      %s180 = sphi 0, %s166
      %s184 = sphi 0, %s184
      %s186 = sphi 0, %s184
      %s187 = sphi 0, %s186
      %s201 = sphi 0, %s187
      %s205 = sphi 0, %s205
      %s207 = sphi 0, %s205
      %s208 = sphi 0, %s207
      %s222 = sphi 0, %s208
      %s228 = sphi 0, %s230
      %s231 = sphi 0, %s228
      %s232 = sphi 0, %s231
      %s248 = sphi 0, %s232
      %s252 = sphi 0, %s252
      %s254 = sphi 0, %s252
      %s255 = sphi 0, %s254
      %s269 = sphi 0, %s255
    $region4: #{tpu_custom_call.1} parent=1 // loop_header_branch
      %33 = sbr.rel (%p31) target = $region8
    $region5: #{tpu_custom_call.1} parent=1 // loop_body
      %s35 = ssub.s32 %s30, 1
      %s36 = ssub.s32 %s30, 2
      %s37 = sadd.s32 %s30, 1
      %s38 = ssub.s32 %s30, %s37
      %p39 = scmp.eq.s32.totalorder %s38, 0
      %s41 = sadd.s32 %s40, 1
      %s42 = scalar_select %p39, %s40, %s41
      %p45 = pneg %p39
      %p46 = scmp.eq.s32.totalorder %s30, 1
      %p47 = por %p45, %p46
      %p48 = scmp.ne.s32.totalorder %s40, %s43
      %p49 = scmp.eq.s32.totalorder %s30, 0
      %p50 = por %p48, %p49
      %p51 = scmp.ne.s32.totalorder %s40, %s43
      %p52 = scmp.eq.s32.totalorder %s35, 1
      %p53 = por %p51, %p52
      %p54 = scmp.ne.s32.totalorder %s43, %s44
      %p55 = scmp.eq.s32.totalorder %s35, 0
      %p56 = por %p54, %p55
      %p57 = scmp.ne.s32.totalorder %s43, %s44
      %p58 = scmp.eq.s32.totalorder %s36, 1
      %p59 = por %p57, %p58
      %p61 = scmp.ne.s32.totalorder %s44, %s60
      %p62 = scmp.eq.s32.totalorder %s36, 0
      %p63 = por %p61, %p62
      %s64 = ssub.s32 %s30, %s37
      %p65 = scmp.eq.s32.totalorder %s64, 0
      %s67 = sadd.s32 %s66, 1
      %s68 = scalar_select %p65, %s66, %s67
      %p71 = pneg %p65
      %p72 = scmp.eq.s32.totalorder %s30, 1
      %p73 = por %p71, %p72
      %p74 = scmp.ne.s32.totalorder %s66, %s69
      %p75 = scmp.eq.s32.totalorder %s30, 0
      %p76 = por %p74, %p75
      %p77 = scmp.ne.s32.totalorder %s66, %s69
      %p78 = scmp.eq.s32.totalorder %s35, 1
      %p79 = por %p77, %p78
      %p80 = scmp.ne.s32.totalorder %s69, %s70
      %p81 = scmp.eq.s32.totalorder %s35, 0
      %p82 = por %p80, %p81
      %p83 = scmp.ne.s32.totalorder %s69, %s70
      %p84 = scmp.eq.s32.totalorder %s36, 1
      %p85 = por %p83, %p84
      %p87 = scmp.ne.s32.totalorder %s70, %s86
      %p88 = scmp.eq.s32.totalorder %s36, 0
      %p89 = por %p87, %p88
      %s90 = ssub.s32 %s30, %s37
      %p91 = scmp.eq.s32.totalorder %s90, 0
      %s93 = sadd.s32 %s92, 1
      %s94 = scalar_select %p91, %s92, %s93
      %p97 = pneg %p91
      %p98 = scmp.eq.s32.totalorder %s30, 1
      %p99 = por %p97, %p98
      %p100 = scmp.ne.s32.totalorder %s92, %s95
      %p101 = scmp.eq.s32.totalorder %s30, 0
      %p102 = por %p100, %p101
      %p103 = scmp.ne.s32.totalorder %s92, %s95
      %p104 = scmp.eq.s32.totalorder %s35, 1
      %p105 = por %p103, %p104
      %p106 = scmp.ne.s32.totalorder %s95, %s96
      %p107 = scmp.eq.s32.totalorder %s35, 0
      %p108 = por %p106, %p107
      %p109 = scmp.ne.s32.totalorder %s95, %s96
      %p110 = scmp.eq.s32.totalorder %s36, 1
      %p111 = por %p109, %p110
      %p113 = scmp.ne.s32.totalorder %s96, %s112
      %p114 = scmp.eq.s32.totalorder %s36, 0
      %p115 = por %p113, %p114
      %s116 = ssub.s32 %s30, %s37
      %p117 = scmp.eq.s32.totalorder %s116, 0
      %s119 = sadd.s32 %s118, 1
      %s120 = scalar_select %p117, %s118, %s119
      %p123 = pneg %p117
      %p124 = scmp.eq.s32.totalorder %s30, 1
      %p125 = por %p123, %p124
      %p126 = scmp.ne.s32.totalorder %s118, %s121
      %p127 = scmp.eq.s32.totalorder %s30, 0
      %p128 = por %p126, %p127
      %p129 = scmp.ne.s32.totalorder %s118, %s121
      %p130 = scmp.eq.s32.totalorder %s35, 1
      %p131 = por %p129, %p130
      %p132 = scmp.ne.s32.totalorder %s121, %s122
      %p133 = scmp.eq.s32.totalorder %s35, 0
      %p134 = por %p132, %p133
      %p135 = scmp.ne.s32.totalorder %s121, %s122
      %p136 = scmp.eq.s32.totalorder %s36, 1
      %p137 = por %p135, %p136
      %p139 = scmp.ne.s32.totalorder %s122, %s138
      %p140 = scmp.eq.s32.totalorder %s36, 0
      %p141 = por %p139, %p140
      %s143 = sadd.s32 %s142, 1
      %p146 = scmp.eq.s32.totalorder %s30, 1
      %p147 = scmp.ne.s32.totalorder %s142, %s144
      %p148 = scmp.eq.s32.totalorder %s30, 0
      %p149 = por %p147, %p148
      %p150 = scmp.ne.s32.totalorder %s142, %s144
      %p151 = scmp.eq.s32.totalorder %s35, 1
      %p152 = por %p150, %p151
      %p153 = scmp.ne.s32.totalorder %s144, %s145
      %p154 = scmp.eq.s32.totalorder %s35, 0
      %p155 = por %p153, %p154
      %p156 = scmp.ne.s32.totalorder %s144, %s145
      %p157 = scmp.eq.s32.totalorder %s36, 1
      %p158 = por %p156, %p157
      %p160 = scmp.ne.s32.totalorder %s145, %s159
      %p161 = scmp.eq.s32.totalorder %s36, 0
      %p162 = por %p160, %p161
      %s164 = sadd.s32 %s163, 1
      %p167 = scmp.eq.s32.totalorder %s30, 1
      %p168 = scmp.ne.s32.totalorder %s163, %s165
      %p169 = scmp.eq.s32.totalorder %s30, 0
      %p170 = por %p168, %p169
      %p171 = scmp.ne.s32.totalorder %s163, %s165
      %p172 = scmp.eq.s32.totalorder %s35, 1
      %p173 = por %p171, %p172
      %p174 = scmp.ne.s32.totalorder %s165, %s166
      %p175 = scmp.eq.s32.totalorder %s35, 0
      %p176 = por %p174, %p175
      %p177 = scmp.ne.s32.totalorder %s165, %s166
      %p178 = scmp.eq.s32.totalorder %s36, 1
      %p179 = por %p177, %p178
      %p181 = scmp.ne.s32.totalorder %s166, %s180
      %p182 = scmp.eq.s32.totalorder %s36, 0
      %p183 = por %p181, %p182
      %s185 = sadd.s32 %s184, 1
      %p188 = scmp.eq.s32.totalorder %s30, 1
      %p189 = scmp.ne.s32.totalorder %s184, %s186
      %p190 = scmp.eq.s32.totalorder %s30, 0
      %p191 = por %p189, %p190
      %p192 = scmp.ne.s32.totalorder %s184, %s186
      %p193 = scmp.eq.s32.totalorder %s35, 1
      %p194 = por %p192, %p193
      %p195 = scmp.ne.s32.totalorder %s186, %s187
      %p196 = scmp.eq.s32.totalorder %s35, 0
      %p197 = por %p195, %p196
      %p198 = scmp.ne.s32.totalorder %s186, %s187
      %p199 = scmp.eq.s32.totalorder %s36, 1
      %p200 = por %p198, %p199
      %p202 = scmp.ne.s32.totalorder %s187, %s201
      %p203 = scmp.eq.s32.totalorder %s36, 0
      %p204 = por %p202, %p203
      %s206 = sadd.s32 %s205, 1
      %p209 = scmp.eq.s32.totalorder %s30, 1
      %p210 = scmp.ne.s32.totalorder %s205, %s207
      %p211 = scmp.eq.s32.totalorder %s30, 0
      %p212 = por %p210, %p211
      %p213 = scmp.ne.s32.totalorder %s205, %s207
      %p214 = scmp.eq.s32.totalorder %s35, 1
      %p215 = por %p213, %p214
      %p216 = scmp.ne.s32.totalorder %s207, %s208
      %p217 = scmp.eq.s32.totalorder %s35, 0
      %p218 = por %p216, %p217
      %p219 = scmp.ne.s32.totalorder %s207, %s208
      %p220 = scmp.eq.s32.totalorder %s36, 1
      %p221 = por %p219, %p220
      %p223 = scmp.ne.s32.totalorder %s208, %s222
      %p224 = scmp.eq.s32.totalorder %s36, 0
      %p225 = por %p223, %p224
      %s226 = ssub.s32 %s30, %s37
      %p227 = scmp.eq.s32.totalorder %s226, 0
      %s229 = sadd.s32 %s228, 1
      %s230 = scalar_select %p227, %s228, %s229
      %p233 = pneg %p227
      %p234 = scmp.eq.s32.totalorder %s30, 1
      %p235 = por %p233, %p234
      %p236 = scmp.ne.s32.totalorder %s228, %s231
      %p237 = scmp.eq.s32.totalorder %s30, 0
      %p238 = por %p236, %p237
      %p239 = scmp.ne.s32.totalorder %s228, %s231
      %p240 = scmp.eq.s32.totalorder %s35, 1
      %p241 = por %p239, %p240
      %p242 = scmp.ne.s32.totalorder %s231, %s232
      %p243 = scmp.eq.s32.totalorder %s35, 0
      %p244 = por %p242, %p243
      %p245 = scmp.ne.s32.totalorder %s231, %s232
      %p246 = scmp.eq.s32.totalorder %s36, 1
      %p247 = por %p245, %p246
      %p249 = scmp.ne.s32.totalorder %s232, %s248
      %p250 = scmp.eq.s32.totalorder %s36, 0
      %p251 = por %p249, %p250
      %s253 = sadd.s32 %s252, 1
      %p256 = scmp.eq.s32.totalorder %s30, 1
      %p257 = scmp.ne.s32.totalorder %s252, %s254
      %p258 = scmp.eq.s32.totalorder %s30, 0
      %p259 = por %p257, %p258
      %p260 = scmp.ne.s32.totalorder %s252, %s254
      %p261 = scmp.eq.s32.totalorder %s35, 1
      %p262 = por %p260, %p261
      %p263 = scmp.ne.s32.totalorder %s254, %s255
      %p264 = scmp.eq.s32.totalorder %s35, 0
      %p265 = por %p263, %p264
      %p266 = scmp.ne.s32.totalorder %s254, %s255
      %p267 = scmp.eq.s32.totalorder %s36, 1
      %p268 = por %p266, %p267
      %p270 = scmp.ne.s32.totalorder %s255, %s269
      %p271 = scmp.eq.s32.totalorder %s36, 0
      %p272 = por %p270, %p271
      %p273 = scmp.le.s32.totalorder 1, %s30
      %p274 = scmp.lt.s32.totalorder %s30, 3
      %p275 = pnand %p273, %p274
      %p276 = pneg %p275
      // Predicated region
      $region9: #{tpu_custom_call.1} parent=5 // pred_check
        _
      $region10: #{tpu_custom_call.1} parent=5 // pred_check_branch
        %278 = sbr.rel (%p275) target = $region12
      $region11: #{tpu_custom_call.1} parent=5 // pred_region
        %s279 = ssub.s32 %s30, 1
        // Predicated region
        $region13: #{tpu_custom_call.1} parent=11 // pred_check
          %p280 = pneg %p155
        $region14: #{tpu_custom_call.1} parent=11 // pred_check_branch
          %282 = sbr.rel (%p280) target = $region16
        $region15: #{tpu_custom_call.1} parent=11 // pred_region
          %s284 = ssub.s32 2048, 2048
          %285 = vsyncadd [#allocation9], %s284
          %s286 = sshll.u32 [#allocation10], 4
          %s287 = int_to_ptr.vmem [resolvable:$true] %s286
          %292 = dma.hbm_to_vmem [thread:$0]  %s4, 2048, %s287, [#allocation9], 128, 128, 8
        $region16: #{tpu_custom_call.1} parent=11 // pred_fallthru
          _
        // Predicated region
        $region17: #{tpu_custom_call.1} parent=11 // pred_check
          %p293 = pneg %p176
        $region18: #{tpu_custom_call.1} parent=11 // pred_check_branch
          %295 = sbr.rel (%p293) target = $region20
        $region19: #{tpu_custom_call.1} parent=11 // pred_region
          %s297 = ssub.s32 2048, 2048
          %298 = vsyncadd [#allocation12], %s297
          %s299 = sshll.u32 [#allocation11], 4
          %s300 = int_to_ptr.vmem [resolvable:$true] %s299
          %305 = dma.hbm_to_vmem [thread:$0]  %s5, 2048, %s300, [#allocation12], 128, 128, 8
        $region20: #{tpu_custom_call.1} parent=11 // pred_fallthru
          _
        // Predicated region
        $region21: #{tpu_custom_call.1} parent=11 // pred_check
          %p306 = pneg %p197
        $region22: #{tpu_custom_call.1} parent=11 // pred_check_branch
          %308 = sbr.rel (%p306) target = $region24
        $region23: #{tpu_custom_call.1} parent=11 // pred_region
          %s310 = ssub.s32 2048, 2048
          %311 = vsyncadd [#allocation12], %s310
          %s312 = sshll.u32 [#allocation13], 4
          %s313 = int_to_ptr.vmem [resolvable:$true] %s312
          %318 = dma.hbm_to_vmem [thread:$0]  %s6, 2048, %s313, [#allocation12], 128, 128, 8
        $region24: #{tpu_custom_call.1} parent=11 // pred_fallthru
          _
        // Predicated region
        $region25: #{tpu_custom_call.1} parent=11 // pred_check
          %p319 = pneg %p218
        $region26: #{tpu_custom_call.1} parent=11 // pred_check_branch
          %321 = sbr.rel (%p319) target = $region28
        $region27: #{tpu_custom_call.1} parent=11 // pred_region
          _
        $region28: #{tpu_custom_call.1} parent=11 // pred_fallthru
          _
      $region12: #{tpu_custom_call.1} parent=5 // pred_fallthru
        _
      %p322 = scmp.lt.s32.totalorder %s30, 2
      // Predicated region
      $region29: #{tpu_custom_call.1} parent=5 // pred_check
        %p323 = pneg %p322
      $region30: #{tpu_custom_call.1} parent=5 // pred_check_branch
        %325 = sbr.rel (%p323) target = $region32
      $region31: #{tpu_custom_call.1} parent=5 // pred_region
        // Predicated region
        $region33: #{tpu_custom_call.1} parent=31 // pred_check
          %p326 = pneg %p50
        $region34: #{tpu_custom_call.1} parent=31 // pred_check_branch
          %328 = sbr.rel (%p326) target = $region36
        $region35: #{tpu_custom_call.1} parent=31 // pred_region
          %s329 = sand.u32 %s40, 1
          %s330 = scalar_lea.sflag [#allocation3], %s329
          %s331 = sand.u32 %s40, 1
          %s332 = smul.addr %s331, 2
          %s333 = scalar_lea.vmem [#allocation2], %s332
          %s334 = smul.u32 2, %s30
          %s336 = ssub.s32 32, 32
          %337 = vsyncadd %s330, %s336
          %s338 = smul.addr %s334, 16
          %s339 = scalar_lea.hbm %s0, %s338
          %s341 = sshll.u32 %s333, 4
          %s342 = int_to_ptr.vmem [resolvable:$true] %s341
          %344 = dma.hbm_to_vmem [thread:$0]  %s339, 32, %s342, %s330
        $region36: #{tpu_custom_call.1} parent=31 // pred_fallthru
          _
        // Predicated region
        $region37: #{tpu_custom_call.1} parent=31 // pred_check
          %p345 = pneg %p76
        $region38: #{tpu_custom_call.1} parent=31 // pred_check_branch
          %347 = sbr.rel (%p345) target = $region40
        $region39: #{tpu_custom_call.1} parent=31 // pred_region
          %s348 = sand.u32 %s30, 1
          %s349 = scalar_lea.sflag [#allocation6], %s348
          %s350 = sand.u32 %s66, 1
          %s351 = smul.addr %s350, 256
          %s352 = scalar_lea.vmem [#allocation5], %s351
          %s353 = smul.u32 32, %s30
          %s355 = ssub.s32 4096, 4096
          %356 = vsyncadd %s349, %s355
          %s357 = smul.addr %s353, 128
          %s358 = scalar_lea.hbm %s1, %s357
          %s359 = sshll.u32 %s352, 4
          %s360 = int_to_ptr.vmem [resolvable:$true] %s359
          %365 = dma.hbm_to_vmem [thread:$0]  %s358, 4096, %s360, %s349, 128, 128, 8
        $region40: #{tpu_custom_call.1} parent=31 // pred_fallthru
          _
        // Predicated region
        $region41: #{tpu_custom_call.1} parent=31 // pred_check
          %p366 = pneg %p102
        $region42: #{tpu_custom_call.1} parent=31 // pred_check_branch
          %368 = sbr.rel (%p366) target = $region44
        $region43: #{tpu_custom_call.1} parent=31 // pred_region
          %s369 = sand.u32 %s30, 1
          %s370 = scalar_lea.sflag [#allocation6], %s369
          %s371 = sand.u32 %s92, 1
          %s372 = smul.addr %s371, 256
          %s373 = scalar_lea.vmem [#allocation7], %s372
          %s374 = smul.u32 32, %s30
          %s376 = ssub.s32 4096, 4096
          %377 = vsyncadd %s370, %s376
          %s378 = smul.addr %s374, 128
          %s379 = scalar_lea.hbm %s2, %s378
          %s380 = sshll.u32 %s373, 4
          %s381 = int_to_ptr.vmem [resolvable:$true] %s380
          %386 = dma.hbm_to_vmem [thread:$0]  %s379, 4096, %s381, %s370, 128, 128, 8
        $region44: #{tpu_custom_call.1} parent=31 // pred_fallthru
          _
        // Predicated region
        $region45: #{tpu_custom_call.1} parent=31 // pred_check
          %p387 = pneg %p128
        $region46: #{tpu_custom_call.1} parent=31 // pred_check_branch
          %389 = sbr.rel (%p387) target = $region48
        $region47: #{tpu_custom_call.1} parent=31 // pred_region
          %s390 = sand.u32 %s30, 1
          %s391 = scalar_lea.sflag [#allocation9], %s390
          %s392 = sand.u32 %s118, 1
          %s393 = smul.addr %s392, 256
          %s394 = scalar_lea.vmem [#allocation8], %s393
          %s395 = smul.u32 32, %s30
          %s397 = ssub.s32 4096, 4096
          %398 = vsyncadd %s391, %s397
          %s399 = smul.addr %s395, 128
          %s400 = scalar_lea.hbm %s3, %s399
          %s401 = sshll.u32 %s394, 4
          %s402 = int_to_ptr.vmem [resolvable:$true] %s401
          %407 = dma.hbm_to_vmem [thread:$0]  %s400, 4096, %s402, %s391, 128, 128, 8
        $region48: #{tpu_custom_call.1} parent=31 // pred_fallthru
          _
      $region32: #{tpu_custom_call.1} parent=5 // pred_fallthru
        _
      %p408 = scmp.le.s32.totalorder 1, %s30
      %p409 = scmp.lt.s32.totalorder %s30, 3
      %p410 = pnand %p408, %p409
      %p411 = pneg %p410
      // Predicated region
      $region49: #{tpu_custom_call.1} parent=5 // pred_check
        _
      $region50: #{tpu_custom_call.1} parent=5 // pred_check_branch
        %413 = sbr.rel (%p410) target = $region52
      $region51: #{tpu_custom_call.1} parent=5 // pred_region
        %s414 = ssub.s32 %s30, 1
        %s415 = sand.u32 %s43, 1
        %s416 = scalar_lea.sflag [#allocation3], %s415
        %s417 = sand.u32 %s43, 1
        %s418 = smul.addr %s417, 2
        %s419 = scalar_lea.vmem [#allocation2], %s418
        // Predicated region
        $region53: #{tpu_custom_call.1} parent=51 // pred_check
          %p420 = pneg %p56
        $region54: #{tpu_custom_call.1} parent=51 // pred_check_branch
          %422 = sbr.rel (%p420) target = $region56
        $region55: #{tpu_custom_call.1} parent=51 // pred_region
          %423 = dma.done %s416, 32
        $region56: #{tpu_custom_call.1} parent=51 // pred_fallthru
          _
        %s424 = sand.u32 %s35, 1
        %s425 = scalar_lea.sflag [#allocation6], %s424
        %s426 = sand.u32 %s69, 1
        %s427 = smul.addr %s426, 256
        %s428 = scalar_lea.vmem [#allocation5], %s427
        // Predicated region
        $region57: #{tpu_custom_call.1} parent=51 // pred_check
          %p429 = pneg %p82
        $region58: #{tpu_custom_call.1} parent=51 // pred_check_branch
          %431 = sbr.rel (%p429) target = $region60
        $region59: #{tpu_custom_call.1} parent=51 // pred_region
          %432 = dma.done %s425, 4096
        $region60: #{tpu_custom_call.1} parent=51 // pred_fallthru
          _
        %s433 = sand.u32 %s35, 1
        %s434 = scalar_lea.sflag [#allocation6], %s433
        %s435 = sand.u32 %s95, 1
        %s436 = smul.addr %s435, 256
        %s437 = scalar_lea.vmem [#allocation7], %s436
        // Predicated region
        $region61: #{tpu_custom_call.1} parent=51 // pred_check
          %p438 = pneg %p108
        $region62: #{tpu_custom_call.1} parent=51 // pred_check_branch
          %440 = sbr.rel (%p438) target = $region64
        $region63: #{tpu_custom_call.1} parent=51 // pred_region
          %441 = dma.done %s434, 4096
        $region64: #{tpu_custom_call.1} parent=51 // pred_fallthru
          _
        %s442 = sand.u32 %s35, 1
        %s443 = scalar_lea.sflag [#allocation9], %s442
        %s444 = sand.u32 %s121, 1
        %s445 = smul.addr %s444, 256
        %s446 = scalar_lea.vmem [#allocation8], %s445
        // Predicated region
        $region65: #{tpu_custom_call.1} parent=51 // pred_check
          %p447 = pneg %p134
        $region66: #{tpu_custom_call.1} parent=51 // pred_check_branch
          %449 = sbr.rel (%p447) target = $region68
        $region67: #{tpu_custom_call.1} parent=51 // pred_region
          %450 = dma.done %s443, 4096
        $region68: #{tpu_custom_call.1} parent=51 // pred_fallthru
          _
        // Predicated region
        $region69: #{tpu_custom_call.1} parent=51 // pred_check
          %p451 = pneg %p155
        $region70: #{tpu_custom_call.1} parent=51 // pred_check_branch
          %453 = sbr.rel (%p451) target = $region72
        $region71: #{tpu_custom_call.1} parent=51 // pred_region
          %454 = dma.done [#allocation9], 2048
        $region72: #{tpu_custom_call.1} parent=51 // pred_fallthru
          _
        // Predicated region
        $region73: #{tpu_custom_call.1} parent=51 // pred_check
          %p455 = pneg %p176
        $region74: #{tpu_custom_call.1} parent=51 // pred_check_branch
          %457 = sbr.rel (%p455) target = $region76
        $region75: #{tpu_custom_call.1} parent=51 // pred_region
          %458 = dma.done [#allocation12], 2048
        $region76: #{tpu_custom_call.1} parent=51 // pred_fallthru
          _
        // Predicated region
        $region77: #{tpu_custom_call.1} parent=51 // pred_check
          %p459 = pneg %p197
        $region78: #{tpu_custom_call.1} parent=51 // pred_check_branch
          %461 = sbr.rel (%p459) target = $region80
        $region79: #{tpu_custom_call.1} parent=51 // pred_region
          %462 = dma.done [#allocation12], 2048
        $region80: #{tpu_custom_call.1} parent=51 // pred_fallthru
          _
        %s463 = sand.u32 %s43, 1
        %s464 = scalar_lea.sflag [#allocation3], %s463
        %s465 = sand.u32 %s43, 1
        %s466 = smul.addr %s465, 2
        %s467 = scalar_lea.vmem [#allocation2], %s466
        %p468 = pneg %p56
        %p469 = pneg %p53
        %s470 = sand.u32 %s35, 1
        %s471 = scalar_lea.sflag [#allocation6], %s470
        %s472 = sand.u32 %s69, 1
        %s473 = smul.addr %s472, 256
        %s474 = scalar_lea.vmem [#allocation5], %s473
        %p475 = pneg %p82
        %p476 = pneg %p79
        %s477 = sand.u32 %s35, 1
        %s478 = scalar_lea.sflag [#allocation6], %s477
        %s479 = sand.u32 %s95, 1
        %s480 = smul.addr %s479, 256
        %s481 = scalar_lea.vmem [#allocation7], %s480
        %p482 = pneg %p108
        %p483 = pneg %p105
        %s484 = sand.u32 %s35, 1
        %s485 = scalar_lea.sflag [#allocation9], %s484
        %s486 = sand.u32 %s121, 1
        %s487 = smul.addr %s486, 256
        %s488 = scalar_lea.vmem [#allocation8], %s487
        %p489 = pneg %p134
        %p490 = pneg %p131
        %p491 = pneg %p155
        %p492 = pneg %p152
        %p493 = pneg %p176
        %p494 = pneg %p173
        %p495 = pneg %p197
        %p496 = pneg %p194
        %p497 = pneg %p218
        %p498 = pneg %p215
        %p499 = pneg %p244
        %p500 = pneg %p241
        %s501 = sand.u32 %s231, 1
        %s502 = scalar_lea.sflag [#allocation4], %s501
        %s503 = sand.u32 %s231, 1
        %s504 = smul.addr %s503, 256
        %s505 = scalar_lea.vmem [#allocation14], %s504
        %p506 = pneg %p265
        %p507 = pneg %p262
        %s508 = smul.u32 2, %s35
        %s509 = smul.u32 32, %s35
        %s510 = smul.u32 32, %s35
        %s511 = smul.u32 32, %s35
        %s512 = smul.u32 32, %s35
        %p513 = scmp.eq.s32.totalorder %s35, 0
        // Predicated region
        $region81: #{tpu_custom_call.1} parent=51 // pred_check
          %p514 = pneg %p513
        $region82: #{tpu_custom_call.1} parent=51 // pred_check_branch
          %516 = sbr.rel (%p514) target = $region84
        $region83: #{tpu_custom_call.1} parent=51 // pred_region
          %517 = vst [vmem:[#allocation15] sm:$0xff] 0.0
          %518 = vst [vmem:[#allocation15 + $0x8] sm:$0xff] 0.0
          %519 = vst [vmem:[#allocation15 + $0x10] sm:$0xff] 0.0
          %520 = vst [vmem:[#allocation15 + $0x18] sm:$0xff] 0.0
          %521 = vst [vmem:[#allocation15 + $0x20] sm:$0xff] 0.0
          %522 = vst [vmem:[#allocation15 + $0x28] sm:$0xff] 0.0
          %523 = vst [vmem:[#allocation15 + $0x30] sm:$0xff] 0.0
          %524 = vst [vmem:[#allocation15 + $0x38] sm:$0xff] 0.0
        $region84: #{tpu_custom_call.1} parent=51 // pred_fallthru
          _
        %v525 = vld [vmem:[%s428] sm:$0xff]
        %v526 = vld [vmem:[%s428 + $0x8] sm:$0xff]
        %v527 = vld [vmem:[%s428 + $0x10] sm:$0xff]
        %v528 = vld [vmem:[%s428 + $0x18] sm:$0xff]
        %v529 = vld [vmem:[%s428 + $0x20] sm:$0xff]
        %v530 = vld [vmem:[%s428 + $0x28] sm:$0xff]
        %v531 = vld [vmem:[%s428 + $0x30] sm:$0xff]
        %v532 = vld [vmem:[%s428 + $0x38] sm:$0xff]
        %v533 = vld [vmem:[%s428 + $0x40] sm:$0xff]
        %v534 = vld [vmem:[%s428 + $0x48] sm:$0xff]
        %v535 = vld [vmem:[%s428 + $0x50] sm:$0xff]
        %v536 = vld [vmem:[%s428 + $0x58] sm:$0xff]
        %v537 = vld [vmem:[%s428 + $0x60] sm:$0xff]
        %v538 = vld [vmem:[%s428 + $0x68] sm:$0xff]
        %v539 = vld [vmem:[%s428 + $0x70] sm:$0xff]
        %v540 = vld [vmem:[%s428 + $0x78] sm:$0xff]
        %v541 = vld [vmem:[%s428 + $0x80] sm:$0xff]
        %v542 = vld [vmem:[%s428 + $0x88] sm:$0xff]
        %v543 = vld [vmem:[%s428 + $0x90] sm:$0xff]
        %v544 = vld [vmem:[%s428 + $0x98] sm:$0xff]
        %v545 = vld [vmem:[%s428 + $0xa0] sm:$0xff]
        %v546 = vld [vmem:[%s428 + $0xa8] sm:$0xff]
        %v547 = vld [vmem:[%s428 + $0xb0] sm:$0xff]
        %v548 = vld [vmem:[%s428 + $0xb8] sm:$0xff]
        %v549 = vld [vmem:[%s428 + $0xc0] sm:$0xff]
        %v550 = vld [vmem:[%s428 + $0xc8] sm:$0xff]
        %v551 = vld [vmem:[%s428 + $0xd0] sm:$0xff]
        %v552 = vld [vmem:[%s428 + $0xd8] sm:$0xff]
        %v553 = vld [vmem:[%s428 + $0xe0] sm:$0xff]
        %v554 = vld [vmem:[%s428 + $0xe8] sm:$0xff]
        %v555 = vld [vmem:[%s428 + $0xf0] sm:$0xff]
        %v556 = vld [vmem:[%s428 + $0xf8] sm:$0xff]
        %v557 = vld [vmem:[#allocation10] sm:$0xff]
        %v558 = vld [vmem:[#allocation10 + $0x8] sm:$0xff]
        %v559 = vld [vmem:[#allocation10 + $0x10] sm:$0xff]
        %v560 = vld [vmem:[#allocation10 + $0x18] sm:$0xff]
        %v561 = vld [vmem:[#allocation10 + $0x20] sm:$0xff]
        %v562 = vld [vmem:[#allocation10 + $0x28] sm:$0xff]
        %v563 = vld [vmem:[#allocation10 + $0x30] sm:$0xff]
        %v564 = vld [vmem:[#allocation10 + $0x38] sm:$0xff]
        %v565 = vld [vmem:[#allocation10 + $0x40] sm:$0xff]
        %v566 = vld [vmem:[#allocation10 + $0x48] sm:$0xff]
        %v567 = vld [vmem:[#allocation10 + $0x50] sm:$0xff]
        %v568 = vld [vmem:[#allocation10 + $0x58] sm:$0xff]
        %v569 = vld [vmem:[#allocation10 + $0x60] sm:$0xff]
        %v570 = vld [vmem:[#allocation10 + $0x68] sm:$0xff]
        %v571 = vld [vmem:[#allocation10 + $0x70] sm:$0xff]
        %v572 = vld [vmem:[#allocation10 + $0x78] sm:$0xff]
        %v573 = vld [vmem:[%s437] sm:$0xff]
        %v574 = vld [vmem:[%s437 + $0x8] sm:$0xff]
        %v575 = vld [vmem:[%s437 + $0x10] sm:$0xff]
        %v576 = vld [vmem:[%s437 + $0x18] sm:$0xff]
        %v577 = vld [vmem:[%s437 + $0x20] sm:$0xff]
        %v578 = vld [vmem:[%s437 + $0x28] sm:$0xff]
        %v579 = vld [vmem:[%s437 + $0x30] sm:$0xff]
        %v580 = vld [vmem:[%s437 + $0x38] sm:$0xff]
        %v581 = vld [vmem:[%s437 + $0x40] sm:$0xff]
        %v582 = vld [vmem:[%s437 + $0x48] sm:$0xff]
        %v583 = vld [vmem:[%s437 + $0x50] sm:$0xff]
        %v584 = vld [vmem:[%s437 + $0x58] sm:$0xff]
        %v585 = vld [vmem:[%s437 + $0x60] sm:$0xff]
        %v586 = vld [vmem:[%s437 + $0x68] sm:$0xff]
        %v587 = vld [vmem:[%s437 + $0x70] sm:$0xff]
        %v588 = vld [vmem:[%s437 + $0x78] sm:$0xff]
        %v589 = vld [vmem:[%s437 + $0x80] sm:$0xff]
        %v590 = vld [vmem:[%s437 + $0x88] sm:$0xff]
        %v591 = vld [vmem:[%s437 + $0x90] sm:$0xff]
        %v592 = vld [vmem:[%s437 + $0x98] sm:$0xff]
        %v593 = vld [vmem:[%s437 + $0xa0] sm:$0xff]
        %v594 = vld [vmem:[%s437 + $0xa8] sm:$0xff]
        %v595 = vld [vmem:[%s437 + $0xb0] sm:$0xff]
        %v596 = vld [vmem:[%s437 + $0xb8] sm:$0xff]
        %v597 = vld [vmem:[%s437 + $0xc0] sm:$0xff]
        %v598 = vld [vmem:[%s437 + $0xc8] sm:$0xff]
        %v599 = vld [vmem:[%s437 + $0xd0] sm:$0xff]
        %v600 = vld [vmem:[%s437 + $0xd8] sm:$0xff]
        %v601 = vld [vmem:[%s437 + $0xe0] sm:$0xff]
        %v602 = vld [vmem:[%s437 + $0xe8] sm:$0xff]
        %v603 = vld [vmem:[%s437 + $0xf0] sm:$0xff]
        %v604 = vld [vmem:[%s437 + $0xf8] sm:$0xff]
        %v605 = vld [vmem:[#allocation11] sm:$0xff]
        %v606 = vld [vmem:[#allocation11 + $0x8] sm:$0xff]
        %v607 = vld [vmem:[#allocation11 + $0x10] sm:$0xff]
        %v608 = vld [vmem:[#allocation11 + $0x18] sm:$0xff]
        %v609 = vld [vmem:[#allocation11 + $0x20] sm:$0xff]
        %v610 = vld [vmem:[#allocation11 + $0x28] sm:$0xff]
        %v611 = vld [vmem:[#allocation11 + $0x30] sm:$0xff]
        %v612 = vld [vmem:[#allocation11 + $0x38] sm:$0xff]
        %v613 = vld [vmem:[#allocation11 + $0x40] sm:$0xff]
        %v614 = vld [vmem:[#allocation11 + $0x48] sm:$0xff]
        %v615 = vld [vmem:[#allocation11 + $0x50] sm:$0xff]
        %v616 = vld [vmem:[#allocation11 + $0x58] sm:$0xff]
        %v617 = vld [vmem:[#allocation11 + $0x60] sm:$0xff]
        %v618 = vld [vmem:[#allocation11 + $0x68] sm:$0xff]
        %v619 = vld [vmem:[#allocation11 + $0x70] sm:$0xff]
        %v620 = vld [vmem:[#allocation11 + $0x78] sm:$0xff]
        %621 = vmatprep.subr.mxu0 0.0
        %622 = vmatpush1.msra.mxu0 %v605
        %623 = vmatprep.subr.mxu0 0.0
        %624 = vmatpush1.msra.mxu0 %v606
        %625 = vmatprep.subr.mxu0 0.0
        %626 = vmatpush1.msra.mxu0 %v607
        %627 = vmatprep.subr.mxu0 0.0
        %628 = vmatpush1.msra.mxu0 %v608
        %629 = vmatprep.subr.mxu0 0.0
        %630 = vmatpush1.msra.mxu0 %v609
        %631 = vmatprep.subr.mxu0 0.0
        %632 = vmatpush1.msra.mxu0 %v610
        %633 = vmatprep.subr.mxu0 0.0
        %634 = vmatpush1.msra.mxu0 %v611
        %635 = vmatprep.subr.mxu0 0.0
        %636 = vmatpush1.msra.mxu0 %v612
        %637 = vmatprep.subr.mxu0 0.0
        %638 = vmatpush1.msra.mxu0 %v613
        %639 = vmatprep.subr.mxu0 0.0
        %640 = vmatpush1.msra.mxu0 %v614
        %641 = vmatprep.subr.mxu0 0.0
        %642 = vmatpush1.msra.mxu0 %v615
        %643 = vmatprep.subr.mxu0 0.0
        %644 = vmatpush1.msra.mxu0 %v616
        %645 = vmatprep.subr.mxu0 0.0
        %646 = vmatpush1.msra.mxu0 %v617
        %647 = vmatprep.subr.mxu0 0.0
        %648 = vmatpush1.msra.mxu0 %v618
        %649 = vmatprep.subr.mxu0 0.0
        %650 = vmatpush1.msra.mxu0 %v619
        %651 = vmatprep.subr.mxu0 0.0
        %652 = vmatpush1.msra.mxu0 %v620
        %653 = vmatprep.subr.mxu0 0.0
        %654 = vmatpush1.msra.mxu0 0.0
        %655 = vmatprep.subr.mxu0 0.0
        %656 = vmatpush1.msra.mxu0 0.0
        %657 = vmatprep.subr.mxu0 0.0
        %658 = vmatpush1.msra.mxu0 0.0
        %659 = vmatprep.subr.mxu0 0.0
        %660 = vmatpush1.msra.mxu0 0.0
        %661 = vmatprep.subr.mxu0 0.0
        %662 = vmatpush1.msra.mxu0 0.0
        %663 = vmatprep.subr.mxu0 0.0
        %664 = vmatpush1.msra.mxu0 0.0
        %665 = vmatprep.subr.mxu0 0.0
        %666 = vmatpush1.msra.mxu0 0.0
        %667 = vmatprep.subr.mxu0 0.0
        %668 = vmatpush1.msra.mxu0 0.0
        %669 = vmatprep.subr.mxu0 0.0
        %670 = vmatpush1.msra.mxu0 0.0
        %671 = vmatprep.subr.mxu0 0.0
        %672 = vmatpush1.msra.mxu0 0.0
        %673 = vmatprep.subr.mxu0 0.0
        %674 = vmatpush1.msra.mxu0 0.0
        %675 = vmatprep.subr.mxu0 0.0
        %676 = vmatpush1.msra.mxu0 0.0
        %677 = vmatprep.subr.mxu0 0.0
        %678 = vmatpush1.msra.mxu0 0.0
        %679 = vmatprep.subr.mxu0 0.0
        %680 = vmatpush1.msra.mxu0 0.0
        %681 = vmatprep.subr.mxu0 0.0
        %682 = vmatpush1.msra.mxu0 0.0
        %683 = vmatprep.subr.mxu0 0.0
        %684 = vmatpush1.msra.mxu0 0.0
        %685 = vmatprep.mubr.f32.mxu0 0.0
        %686 = vmatmul.mubr.f32.gmra.mrb[0].mxu0 %v573
        %v687 = vpop.f32.mrb[0].mxu0
        %v688 = vadd.f32 0.0, %v687
        %v689 = vpop.f32.mrb[0].mxu0
        %690 = vmatprep.mubr.f32.mxu0 0.0
        %691 = vmatmul.mubr.f32.gmra.mrb[0].mxu0 %v574
        %v692 = vpop.f32.mrb[0].mxu0
        %v693 = vadd.f32 0.0, %v692
        %v694 = vpop.f32.mrb[0].mxu0
        %695 = vmatprep.mubr.f32.mxu0 0.0
        %696 = vmatmul.mubr.f32.gmra.mrb[0].mxu0 %v575
        %v697 = vpop.f32.mrb[0].mxu0
        %v698 = vadd.f32 0.0, %v697
        %v699 = vpop.f32.mrb[0].mxu0
        %700 = vmatprep.mubr.f32.mxu0 0.0
        %701 = vmatmul.mubr.f32.gmra.mrb[0].mxu0 %v576
        %v702 = vpop.f32.mrb[0].mxu0
        %v703 = vadd.f32 0.0, %v702
        %v704 = vpop.f32.mrb[0].mxu0
        %705 = vmatprep.mubr.f32.mxu0 0.0
        %706 = vmatmul.mubr.f32.gmra.mrb[0].mxu0 %v577
        %v707 = vpop.f32.mrb[0].mxu0
        %v708 = vadd.f32 0.0, %v707
        %v709 = vpop.f32.mrb[0].mxu0
        %710 = vmatprep.mubr.f32.mxu0 0.0
        %711 = vmatmul.mubr.f32.gmra.mrb[0].mxu0 %v578
        %v712 = vpop.f32.mrb[0].mxu0
        %v713 = vadd.f32 0.0, %v712
        %v714 = vpop.f32.mrb[0].mxu0
        %715 = vmatprep.mubr.f32.mxu0 0.0
        %716 = vmatmul.mubr.f32.gmra.mrb[0].mxu0 %v579
        %v717 = vpop.f32.mrb[0].mxu0
        %v718 = vadd.f32 0.0, %v717
        %v719 = vpop.f32.mrb[0].mxu0
        %720 = vmatprep.mubr.f32.mxu0 0.0
        %721 = vmatmul.mubr.f32.gmra.mrb[0].mxu0 %v580
        %v722 = vpop.f32.mrb[0].mxu0
        %v723 = vadd.f32 0.0, %v722
        %v724 = vpop.f32.mrb[0].mxu0
        %725 = vmatprep.mubr.f32.mxu0 0.0
        %726 = vmatmul.mubr.f32.gmra.mrb[0].mxu0 %v581
        %v727 = vpop.f32.mrb[0].mxu0
        %v728 = vadd.f32 0.0, %v727
        %v729 = vpop.f32.mrb[0].mxu0
        %730 = vmatprep.mubr.f32.mxu0 0.0
        %731 = vmatmul.mubr.f32.gmra.mrb[0].mxu0 %v582
        %v732 = vpop.f32.mrb[0].mxu0
        %v733 = vadd.f32 0.0, %v732
        %v734 = vpop.f32.mrb[0].mxu0
        %735 = vmatprep.mubr.f32.mxu0 0.0
        %736 = vmatmul.mubr.f32.gmra.mrb[0].mxu0 %v583
        %v737 = vpop.f32.mrb[0].mxu0
        %v738 = vadd.f32 0.0, %v737
        %v739 = vpop.f32.mrb[0].mxu0
        %740 = vmatprep.mubr.f32.mxu0 0.0
        %741 = vmatmul.mubr.f32.gmra.mrb[0].mxu0 %v584
        %v742 = vpop.f32.mrb[0].mxu0
        %v743 = vadd.f32 0.0, %v742
        %v744 = vpop.f32.mrb[0].mxu0
        %745 = vmatprep.mubr.f32.mxu0 0.0
        %746 = vmatmul.mubr.f32.gmra.mrb[0].mxu0 %v585
        %v747 = vpop.f32.mrb[0].mxu0
        %v748 = vadd.f32 0.0, %v747
        %v749 = vpop.f32.mrb[0].mxu0
        %750 = vmatprep.mubr.f32.mxu0 0.0
        %751 = vmatmul.mubr.f32.gmra.mrb[0].mxu0 %v586
        %v752 = vpop.f32.mrb[0].mxu0
        %v753 = vadd.f32 0.0, %v752
        %v754 = vpop.f32.mrb[0].mxu0
        %755 = vmatprep.mubr.f32.mxu0 0.0
        %756 = vmatmul.mubr.f32.gmra.mrb[0].mxu0 %v587
        %v757 = vpop.f32.mrb[0].mxu0
        %v758 = vadd.f32 0.0, %v757
        %v759 = vpop.f32.mrb[0].mxu0
        %760 = vmatprep.mubr.f32.mxu0 0.0
        %761 = vmatmul.mubr.f32.gmra.mrb[0].mxu0 %v588
        %v762 = vpop.f32.mrb[0].mxu0
        %v763 = vadd.f32 0.0, %v762
        %v764 = vpop.f32.mrb[0].mxu0
        %765 = vmatprep.mubr.f32.mxu0 0.0
        %766 = vmatmul.mubr.f32.gmra.mrb[0].mxu0 %v589
        %v767 = vpop.f32.mrb[0].mxu0
        %v768 = vadd.f32 0.0, %v767
        %v769 = vpop.f32.mrb[0].mxu0
        %770 = vmatprep.mubr.f32.mxu0 0.0
        %771 = vmatmul.mubr.f32.gmra.mrb[0].mxu0 %v590
        %v772 = vpop.f32.mrb[0].mxu0
        %v773 = vadd.f32 0.0, %v772
        %v774 = vpop.f32.mrb[0].mxu0
        %775 = vmatprep.mubr.f32.mxu0 0.0
        %776 = vmatmul.mubr.f32.gmra.mrb[0].mxu0 %v591
        %v777 = vpop.f32.mrb[0].mxu0
        %v778 = vadd.f32 0.0, %v777
        %v779 = vpop.f32.mrb[0].mxu0
        %780 = vmatprep.mubr.f32.mxu0 0.0
        %781 = vmatmul.mubr.f32.gmra.mrb[0].mxu0 %v592
        %v782 = vpop.f32.mrb[0].mxu0
        %v783 = vadd.f32 0.0, %v782
        %v784 = vpop.f32.mrb[0].mxu0
        %785 = vmatprep.mubr.f32.mxu0 0.0
        %786 = vmatmul.mubr.f32.gmra.mrb[0].mxu0 %v593
        %v787 = vpop.f32.mrb[0].mxu0
        %v788 = vadd.f32 0.0, %v787
        %v789 = vpop.f32.mrb[0].mxu0
        %790 = vmatprep.mubr.f32.mxu0 0.0
        %791 = vmatmul.mubr.f32.gmra.mrb[0].mxu0 %v594
        %v792 = vpop.f32.mrb[0].mxu0
        %v793 = vadd.f32 0.0, %v792
        %v794 = vpop.f32.mrb[0].mxu0
        %795 = vmatprep.mubr.f32.mxu0 0.0
        %796 = vmatmul.mubr.f32.gmra.mrb[0].mxu0 %v595
        %v797 = vpop.f32.mrb[0].mxu0
        %v798 = vadd.f32 0.0, %v797
        %v799 = vpop.f32.mrb[0].mxu0
        %800 = vmatprep.mubr.f32.mxu0 0.0
        %801 = vmatmul.mubr.f32.gmra.mrb[0].mxu0 %v596
        %v802 = vpop.f32.mrb[0].mxu0
        %v803 = vadd.f32 0.0, %v802
        %v804 = vpop.f32.mrb[0].mxu0
        %805 = vmatprep.mubr.f32.mxu0 0.0
        %806 = vmatmul.mubr.f32.gmra.mrb[0].mxu0 %v597
        %v807 = vpop.f32.mrb[0].mxu0
        %v808 = vadd.f32 0.0, %v807
        %v809 = vpop.f32.mrb[0].mxu0
        %810 = vmatprep.mubr.f32.mxu0 0.0
        %811 = vmatmul.mubr.f32.gmra.mrb[0].mxu0 %v598
        %v812 = vpop.f32.mrb[0].mxu0
        %v813 = vadd.f32 0.0, %v812
        %v814 = vpop.f32.mrb[0].mxu0
        %815 = vmatprep.mubr.f32.mxu0 0.0
        %816 = vmatmul.mubr.f32.gmra.mrb[0].mxu0 %v599
        %v817 = vpop.f32.mrb[0].mxu0
        %v818 = vadd.f32 0.0, %v817
        %v819 = vpop.f32.mrb[0].mxu0
        %820 = vmatprep.mubr.f32.mxu0 0.0
        %821 = vmatmul.mubr.f32.gmra.mrb[0].mxu0 %v600
        %v822 = vpop.f32.mrb[0].mxu0
        %v823 = vadd.f32 0.0, %v822
        %v824 = vpop.f32.mrb[0].mxu0
        %825 = vmatprep.mubr.f32.mxu0 0.0
        %826 = vmatmul.mubr.f32.gmra.mrb[0].mxu0 %v601
        %v827 = vpop.f32.mrb[0].mxu0
        %v828 = vadd.f32 0.0, %v827
        %v829 = vpop.f32.mrb[0].mxu0
        %830 = vmatprep.mubr.f32.mxu0 0.0
        %831 = vmatmul.mubr.f32.gmra.mrb[0].mxu0 %v602
        %v832 = vpop.f32.mrb[0].mxu0
        %v833 = vadd.f32 0.0, %v832
        %v834 = vpop.f32.mrb[0].mxu0
        %835 = vmatprep.mubr.f32.mxu0 0.0
        %836 = vmatmul.mubr.f32.gmra.mrb[0].mxu0 %v603
        %v837 = vpop.f32.mrb[0].mxu0
        %v838 = vadd.f32 0.0, %v837
        %v839 = vpop.f32.mrb[0].mxu0
        %840 = vmatprep.mubr.f32.mxu0 0.0
        %841 = vmatmul.mubr.f32.gmra.mrb[0].mxu0 %v604
        %v842 = vpop.f32.mrb[0].mxu0
        %v843 = vadd.f32 0.0, %v842
        %v844 = vpop.f32.mrb[0].mxu0
        %845 = vdwg.mxu0
        %846 = vmatprep.subr.mxu0 0.0
        %847 = vmatpush1.msra.mxu0 %v557
        %848 = vmatprep.subr.mxu0 0.0
        %849 = vmatpush1.msra.mxu0 %v558
        %850 = vmatprep.subr.mxu0 0.0
        %851 = vmatpush1.msra.mxu0 %v559
        %852 = vmatprep.subr.mxu0 0.0
        %853 = vmatpush1.msra.mxu0 %v560
        %854 = vmatprep.subr.mxu0 0.0
        %855 = vmatpush1.msra.mxu0 %v561
        %856 = vmatprep.subr.mxu0 0.0
        %857 = vmatpush1.msra.mxu0 %v562
        %858 = vmatprep.subr.mxu0 0.0
        %859 = vmatpush1.msra.mxu0 %v563
        %860 = vmatprep.subr.mxu0 0.0
        %861 = vmatpush1.msra.mxu0 %v564
        %862 = vmatprep.subr.mxu0 0.0
        %863 = vmatpush1.msra.mxu0 %v565
        %864 = vmatprep.subr.mxu0 0.0
        %865 = vmatpush1.msra.mxu0 %v566
        %866 = vmatprep.subr.mxu0 0.0
        %867 = vmatpush1.msra.mxu0 %v567
        %868 = vmatprep.subr.mxu0 0.0
        %869 = vmatpush1.msra.mxu0 %v568
        %870 = vmatprep.subr.mxu0 0.0
        %871 = vmatpush1.msra.mxu0 %v569
        %872 = vmatprep.subr.mxu0 0.0
        %873 = vmatpush1.msra.mxu0 %v570
        %874 = vmatprep.subr.mxu0 0.0
        %875 = vmatpush1.msra.mxu0 %v571
        %876 = vmatprep.subr.mxu0 0.0
        %877 = vmatpush1.msra.mxu0 %v572
        %878 = vmatprep.subr.mxu0 0.0
        %879 = vmatpush1.msra.mxu0 0.0
        %880 = vmatprep.subr.mxu0 0.0
        %881 = vmatpush1.msra.mxu0 0.0
        %882 = vmatprep.subr.mxu0 0.0
        %883 = vmatpush1.msra.mxu0 0.0
        %884 = vmatprep.subr.mxu0 0.0
        %885 = vmatpush1.msra.mxu0 0.0
        %886 = vmatprep.subr.mxu0 0.0
        %887 = vmatpush1.msra.mxu0 0.0
        %888 = vmatprep.subr.mxu0 0.0
        %889 = vmatpush1.msra.mxu0 0.0
        %890 = vmatprep.subr.mxu0 0.0
        %891 = vmatpush1.msra.mxu0 0.0
        %892 = vmatprep.subr.mxu0 0.0
        %893 = vmatpush1.msra.mxu0 0.0
        %894 = vmatprep.subr.mxu0 0.0
        %895 = vmatpush1.msra.mxu0 0.0
        %896 = vmatprep.subr.mxu0 0.0
        %897 = vmatpush1.msra.mxu0 0.0
        %898 = vmatprep.subr.mxu0 0.0
        %899 = vmatpush1.msra.mxu0 0.0
        %900 = vmatprep.subr.mxu0 0.0
        %901 = vmatpush1.msra.mxu0 0.0
        %902 = vmatprep.subr.mxu0 0.0
        %903 = vmatpush1.msra.mxu0 0.0
        %904 = vmatprep.subr.mxu0 0.0
        %905 = vmatpush1.msra.mxu0 0.0
        %906 = vmatprep.subr.mxu0 0.0
        %907 = vmatpush1.msra.mxu0 0.0
        %908 = vmatprep.subr.mxu0 0.0
        %909 = vmatpush1.msra.mxu0 0.0
        %910 = vmatprep.mubr.f32.mxu0 0.0
        %911 = vmatmul.mubr.f32.gmra.mrb[0].mxu0 %v525
        %v912 = vpop.f32.mrb[0].mxu0
        %v913 = vadd.f32 %v688, %v912
        %v914 = vpop.f32.mrb[0].mxu0
        %915 = vmatprep.mubr.f32.mxu0 0.0
        %916 = vmatmul.mubr.f32.gmra.mrb[0].mxu0 %v526
        %v917 = vpop.f32.mrb[0].mxu0
        %v918 = vadd.f32 %v693, %v917
        %v919 = vpop.f32.mrb[0].mxu0
        %920 = vmatprep.mubr.f32.mxu0 0.0
        %921 = vmatmul.mubr.f32.gmra.mrb[0].mxu0 %v527
        %v922 = vpop.f32.mrb[0].mxu0
        %v923 = vadd.f32 %v698, %v922
        %v924 = vpop.f32.mrb[0].mxu0
        %925 = vmatprep.mubr.f32.mxu0 0.0
        %926 = vmatmul.mubr.f32.gmra.mrb[0].mxu0 %v528
        %v927 = vpop.f32.mrb[0].mxu0
        %v928 = vadd.f32 %v703, %v927
        %v929 = vpop.f32.mrb[0].mxu0
        %930 = vmatprep.mubr.f32.mxu0 0.0
        %931 = vmatmul.mubr.f32.gmra.mrb[0].mxu0 %v529
        %v932 = vpop.f32.mrb[0].mxu0
        %v933 = vadd.f32 %v708, %v932
        %v934 = vpop.f32.mrb[0].mxu0
        %935 = vmatprep.mubr.f32.mxu0 0.0
        %936 = vmatmul.mubr.f32.gmra.mrb[0].mxu0 %v530
        %v937 = vpop.f32.mrb[0].mxu0
        %v938 = vadd.f32 %v713, %v937
        %v939 = vpop.f32.mrb[0].mxu0
        %940 = vmatprep.mubr.f32.mxu0 0.0
        %941 = vmatmul.mubr.f32.gmra.mrb[0].mxu0 %v531
        %v942 = vpop.f32.mrb[0].mxu0
        %v943 = vadd.f32 %v718, %v942
        %v944 = vpop.f32.mrb[0].mxu0
        %945 = vmatprep.mubr.f32.mxu0 0.0
        %946 = vmatmul.mubr.f32.gmra.mrb[0].mxu0 %v532
        %v947 = vpop.f32.mrb[0].mxu0
        %v948 = vadd.f32 %v723, %v947
        %v949 = vpop.f32.mrb[0].mxu0
        %950 = vmatprep.mubr.f32.mxu0 0.0
        %951 = vmatmul.mubr.f32.gmra.mrb[0].mxu0 %v533
        %v952 = vpop.f32.mrb[0].mxu0
        %v953 = vadd.f32 %v728, %v952
        %v954 = vpop.f32.mrb[0].mxu0
        %955 = vmatprep.mubr.f32.mxu0 0.0
        %956 = vmatmul.mubr.f32.gmra.mrb[0].mxu0 %v534
        %v957 = vpop.f32.mrb[0].mxu0
        %v958 = vadd.f32 %v733, %v957
        %v959 = vpop.f32.mrb[0].mxu0
        %960 = vmatprep.mubr.f32.mxu0 0.0
        %961 = vmatmul.mubr.f32.gmra.mrb[0].mxu0 %v535
        %v962 = vpop.f32.mrb[0].mxu0
        %v963 = vadd.f32 %v738, %v962
        %v964 = vpop.f32.mrb[0].mxu0
        %965 = vmatprep.mubr.f32.mxu0 0.0
        %966 = vmatmul.mubr.f32.gmra.mrb[0].mxu0 %v536
        %v967 = vpop.f32.mrb[0].mxu0
        %v968 = vadd.f32 %v743, %v967
        %v969 = vpop.f32.mrb[0].mxu0
        %970 = vmatprep.mubr.f32.mxu0 0.0
        %971 = vmatmul.mubr.f32.gmra.mrb[0].mxu0 %v537
        %v972 = vpop.f32.mrb[0].mxu0
        %v973 = vadd.f32 %v748, %v972
        %v974 = vpop.f32.mrb[0].mxu0
        %975 = vmatprep.mubr.f32.mxu0 0.0
        %976 = vmatmul.mubr.f32.gmra.mrb[0].mxu0 %v538
        %v977 = vpop.f32.mrb[0].mxu0
        %v978 = vadd.f32 %v753, %v977
        %v979 = vpop.f32.mrb[0].mxu0
        %980 = vmatprep.mubr.f32.mxu0 0.0
        %981 = vmatmul.mubr.f32.gmra.mrb[0].mxu0 %v539
        %v982 = vpop.f32.mrb[0].mxu0
        %v983 = vadd.f32 %v758, %v982
        %v984 = vpop.f32.mrb[0].mxu0
        %985 = vmatprep.mubr.f32.mxu0 0.0
        %986 = vmatmul.mubr.f32.gmra.mrb[0].mxu0 %v540
        %v987 = vpop.f32.mrb[0].mxu0
        %v988 = vadd.f32 %v763, %v987
        %v989 = vpop.f32.mrb[0].mxu0
        %990 = vmatprep.mubr.f32.mxu0 0.0
        %991 = vmatmul.mubr.f32.gmra.mrb[0].mxu0 %v541
        %v992 = vpop.f32.mrb[0].mxu0
        %v993 = vadd.f32 %v768, %v992
        %v994 = vpop.f32.mrb[0].mxu0
        %995 = vmatprep.mubr.f32.mxu0 0.0
        %996 = vmatmul.mubr.f32.gmra.mrb[0].mxu0 %v542
        %v997 = vpop.f32.mrb[0].mxu0
        %v998 = vadd.f32 %v773, %v997
        %v999 = vpop.f32.mrb[0].mxu0
        %1000 = vmatprep.mubr.f32.mxu0 0.0
        %1001 = vmatmul.mubr.f32.gmra.mrb[0].mxu0 %v543
        %v1002 = vpop.f32.mrb[0].mxu0
        %v1003 = vadd.f32 %v778, %v1002
        %v1004 = vpop.f32.mrb[0].mxu0
        %1005 = vmatprep.mubr.f32.mxu0 0.0
        %1006 = vmatmul.mubr.f32.gmra.mrb[0].mxu0 %v544
        %v1007 = vpop.f32.mrb[0].mxu0
        %v1008 = vadd.f32 %v783, %v1007
        %v1009 = vpop.f32.mrb[0].mxu0
        %1010 = vmatprep.mubr.f32.mxu0 0.0
        %1011 = vmatmul.mubr.f32.gmra.mrb[0].mxu0 %v545
        %v1012 = vpop.f32.mrb[0].mxu0
        %v1013 = vadd.f32 %v788, %v1012
        %v1014 = vpop.f32.mrb[0].mxu0
        %1015 = vmatprep.mubr.f32.mxu0 0.0
        %1016 = vmatmul.mubr.f32.gmra.mrb[0].mxu0 %v546
        %v1017 = vpop.f32.mrb[0].mxu0
        %v1018 = vadd.f32 %v793, %v1017
        %v1019 = vpop.f32.mrb[0].mxu0
        %1020 = vmatprep.mubr.f32.mxu0 0.0
        %1021 = vmatmul.mubr.f32.gmra.mrb[0].mxu0 %v547
        %v1022 = vpop.f32.mrb[0].mxu0
        %v1023 = vadd.f32 %v798, %v1022
        %v1024 = vpop.f32.mrb[0].mxu0
        %1025 = vmatprep.mubr.f32.mxu0 0.0
        %1026 = vmatmul.mubr.f32.gmra.mrb[0].mxu0 %v548
        %v1027 = vpop.f32.mrb[0].mxu0
        %v1028 = vadd.f32 %v803, %v1027
        %v1029 = vpop.f32.mrb[0].mxu0
        %1030 = vmatprep.mubr.f32.mxu0 0.0
        %1031 = vmatmul.mubr.f32.gmra.mrb[0].mxu0 %v549
        %v1032 = vpop.f32.mrb[0].mxu0
        %v1033 = vadd.f32 %v808, %v1032
        %v1034 = vpop.f32.mrb[0].mxu0
        %1035 = vmatprep.mubr.f32.mxu0 0.0
        %1036 = vmatmul.mubr.f32.gmra.mrb[0].mxu0 %v550
        %v1037 = vpop.f32.mrb[0].mxu0
        %v1038 = vadd.f32 %v813, %v1037
        %v1039 = vpop.f32.mrb[0].mxu0
        %1040 = vmatprep.mubr.f32.mxu0 0.0
        %1041 = vmatmul.mubr.f32.gmra.mrb[0].mxu0 %v551
        %v1042 = vpop.f32.mrb[0].mxu0
        %v1043 = vadd.f32 %v818, %v1042
        %v1044 = vpop.f32.mrb[0].mxu0
        %1045 = vmatprep.mubr.f32.mxu0 0.0
        %1046 = vmatmul.mubr.f32.gmra.mrb[0].mxu0 %v552
        %v1047 = vpop.f32.mrb[0].mxu0
        %v1048 = vadd.f32 %v823, %v1047
        %v1049 = vpop.f32.mrb[0].mxu0
        %1050 = vmatprep.mubr.f32.mxu0 0.0
        %1051 = vmatmul.mubr.f32.gmra.mrb[0].mxu0 %v553
        %v1052 = vpop.f32.mrb[0].mxu0
        %v1053 = vadd.f32 %v828, %v1052
        %v1054 = vpop.f32.mrb[0].mxu0
        %1055 = vmatprep.mubr.f32.mxu0 0.0
        %1056 = vmatmul.mubr.f32.gmra.mrb[0].mxu0 %v554
        %v1057 = vpop.f32.mrb[0].mxu0
        %v1058 = vadd.f32 %v833, %v1057
        %v1059 = vpop.f32.mrb[0].mxu0
        %1060 = vmatprep.mubr.f32.mxu0 0.0
        %1061 = vmatmul.mubr.f32.gmra.mrb[0].mxu0 %v555
        %v1062 = vpop.f32.mrb[0].mxu0
        %v1063 = vadd.f32 %v838, %v1062
        %v1064 = vpop.f32.mrb[0].mxu0
        %1065 = vmatprep.mubr.f32.mxu0 0.0
        %1066 = vmatmul.mubr.f32.gmra.mrb[0].mxu0 %v556
        %v1067 = vpop.f32.mrb[0].mxu0
        %v1068 = vadd.f32 %v843, %v1067
        %v1069 = vpop.f32.mrb[0].mxu0
        %1070 = vdwg.mxu0
        %v1071 = vld [vmem:[%s446] sm:$0xff]
        %v1072 = vld [vmem:[%s446 + $0x8] sm:$0xff]
        %v1073 = vld [vmem:[%s446 + $0x10] sm:$0xff]
        %v1074 = vld [vmem:[%s446 + $0x18] sm:$0xff]
        %v1075 = vld [vmem:[%s446 + $0x20] sm:$0xff]
        %v1076 = vld [vmem:[%s446 + $0x28] sm:$0xff]
        %v1077 = vld [vmem:[%s446 + $0x30] sm:$0xff]
        %v1078 = vld [vmem:[%s446 + $0x38] sm:$0xff]
        %v1079 = vld [vmem:[%s446 + $0x40] sm:$0xff]
        %v1080 = vld [vmem:[%s446 + $0x48] sm:$0xff]
        %v1081 = vld [vmem:[%s446 + $0x50] sm:$0xff]
        %v1082 = vld [vmem:[%s446 + $0x58] sm:$0xff]
        %v1083 = vld [vmem:[%s446 + $0x60] sm:$0xff]
        %v1084 = vld [vmem:[%s446 + $0x68] sm:$0xff]
        %v1085 = vld [vmem:[%s446 + $0x70] sm:$0xff]
        %v1086 = vld [vmem:[%s446 + $0x78] sm:$0xff]
        %v1087 = vld [vmem:[%s446 + $0x80] sm:$0xff]
        %v1088 = vld [vmem:[%s446 + $0x88] sm:$0xff]
        %v1089 = vld [vmem:[%s446 + $0x90] sm:$0xff]
        %v1090 = vld [vmem:[%s446 + $0x98] sm:$0xff]
        %v1091 = vld [vmem:[%s446 + $0xa0] sm:$0xff]
        %v1092 = vld [vmem:[%s446 + $0xa8] sm:$0xff]
        %v1093 = vld [vmem:[%s446 + $0xb0] sm:$0xff]
        %v1094 = vld [vmem:[%s446 + $0xb8] sm:$0xff]
        %v1095 = vld [vmem:[%s446 + $0xc0] sm:$0xff]
        %v1096 = vld [vmem:[%s446 + $0xc8] sm:$0xff]
        %v1097 = vld [vmem:[%s446 + $0xd0] sm:$0xff]
        %v1098 = vld [vmem:[%s446 + $0xd8] sm:$0xff]
        %v1099 = vld [vmem:[%s446 + $0xe0] sm:$0xff]
        %v1100 = vld [vmem:[%s446 + $0xe8] sm:$0xff]
        %v1101 = vld [vmem:[%s446 + $0xf0] sm:$0xff]
        %v1102 = vld [vmem:[%s446 + $0xf8] sm:$0xff]
        %v1103 = vadd.f32 %v913, %v1071
        %v1104 = vadd.f32 %v918, %v1072
        %v1105 = vadd.f32 %v923, %v1073
        %v1106 = vadd.f32 %v928, %v1074
        %v1107 = vadd.f32 %v933, %v1075
        %v1108 = vadd.f32 %v938, %v1076
        %v1109 = vadd.f32 %v943, %v1077
        %v1110 = vadd.f32 %v948, %v1078
        %v1111 = vadd.f32 %v953, %v1079
        %v1112 = vadd.f32 %v958, %v1080
        %v1113 = vadd.f32 %v963, %v1081
        %v1114 = vadd.f32 %v968, %v1082
        %v1115 = vadd.f32 %v973, %v1083
        %v1116 = vadd.f32 %v978, %v1084
        %v1117 = vadd.f32 %v983, %v1085
        %v1118 = vadd.f32 %v988, %v1086
        %v1119 = vadd.f32 %v993, %v1087
        %v1120 = vadd.f32 %v998, %v1088
        %v1121 = vadd.f32 %v1003, %v1089
        %v1122 = vadd.f32 %v1008, %v1090
        %v1123 = vadd.f32 %v1013, %v1091
        %v1124 = vadd.f32 %v1018, %v1092
        %v1125 = vadd.f32 %v1023, %v1093
        %v1126 = vadd.f32 %v1028, %v1094
        %v1127 = vadd.f32 %v1033, %v1095
        %v1128 = vadd.f32 %v1038, %v1096
        %v1129 = vadd.f32 %v1043, %v1097
        %v1130 = vadd.f32 %v1048, %v1098
        %v1131 = vadd.f32 %v1053, %v1099
        %v1132 = vadd.f32 %v1058, %v1100
        %v1133 = vadd.f32 %v1063, %v1101
        %v1134 = vadd.f32 %v1068, %v1102
        %v1135 = vmax.f32 %v1103, 0.0
        %v1136 = vmax.f32 %v1104, 0.0
        %v1137 = vmax.f32 %v1105, 0.0
        %v1138 = vmax.f32 %v1106, 0.0
        %v1139 = vmax.f32 %v1107, 0.0
        %v1140 = vmax.f32 %v1108, 0.0
        %v1141 = vmax.f32 %v1109, 0.0
        %v1142 = vmax.f32 %v1110, 0.0
        %v1143 = vmax.f32 %v1111, 0.0
        %v1144 = vmax.f32 %v1112, 0.0
        %v1145 = vmax.f32 %v1113, 0.0
        %v1146 = vmax.f32 %v1114, 0.0
        %v1147 = vmax.f32 %v1115, 0.0
        %v1148 = vmax.f32 %v1116, 0.0
        %v1149 = vmax.f32 %v1117, 0.0
        %v1150 = vmax.f32 %v1118, 0.0
        %v1151 = vmax.f32 %v1119, 0.0
        %v1152 = vmax.f32 %v1120, 0.0
        %v1153 = vmax.f32 %v1121, 0.0
        %v1154 = vmax.f32 %v1122, 0.0
        %v1155 = vmax.f32 %v1123, 0.0
        %v1156 = vmax.f32 %v1124, 0.0
        %v1157 = vmax.f32 %v1125, 0.0
        %v1158 = vmax.f32 %v1126, 0.0
        %v1159 = vmax.f32 %v1127, 0.0
        %v1160 = vmax.f32 %v1128, 0.0
        %v1161 = vmax.f32 %v1129, 0.0
        %v1162 = vmax.f32 %v1130, 0.0
        %v1163 = vmax.f32 %v1131, 0.0
        %v1164 = vmax.f32 %v1132, 0.0
        %v1165 = vmax.f32 %v1133, 0.0
        %v1166 = vmax.f32 %v1134, 0.0
        %v1167 = vld [vmem:[#allocation13] sm:$0xff]
        %v1168 = vld [vmem:[#allocation13 + $0x8] sm:$0xff]
        %v1169 = vld [vmem:[#allocation13 + $0x10] sm:$0xff]
        %v1170 = vld [vmem:[#allocation13 + $0x18] sm:$0xff]
        %v1171 = vld [vmem:[#allocation13 + $0x20] sm:$0xff]
        %v1172 = vld [vmem:[#allocation13 + $0x28] sm:$0xff]
        %v1173 = vld [vmem:[#allocation13 + $0x30] sm:$0xff]
        %v1174 = vld [vmem:[#allocation13 + $0x38] sm:$0xff]
        %v1175 = vld [vmem:[#allocation13 + $0x40] sm:$0xff]
        %v1176 = vld [vmem:[#allocation13 + $0x48] sm:$0xff]
        %v1177 = vld [vmem:[#allocation13 + $0x50] sm:$0xff]
        %v1178 = vld [vmem:[#allocation13 + $0x58] sm:$0xff]
        %v1179 = vld [vmem:[#allocation13 + $0x60] sm:$0xff]
        %v1180 = vld [vmem:[#allocation13 + $0x68] sm:$0xff]
        %v1181 = vld [vmem:[#allocation13 + $0x70] sm:$0xff]
        %v1182 = vld [vmem:[#allocation13 + $0x78] sm:$0xff]
        %v1183 = vld [vmem:[%s7] sm:$0x1]
        %v1185 = vlaneseq
        %v1186 = vshrl.u32 %v1185, 7
        %v1187 = vsub.s32 0, %v1186
        %v1188 = vrot.slane %v1183, %v1187
        %1190 = vmatprep.subr.mxu0 0.0
        %1191 = vmatpush1.msra.mxu0 %v1167
        %1192 = vmatprep.subr.mxu0 0.0
        %1193 = vmatpush1.msra.mxu0 %v1168
        %1194 = vmatprep.subr.mxu0 0.0
        %1195 = vmatpush1.msra.mxu0 %v1169
        %1196 = vmatprep.subr.mxu0 0.0
        %1197 = vmatpush1.msra.mxu0 %v1170
        %1198 = vmatprep.subr.mxu0 0.0
        %1199 = vmatpush1.msra.mxu0 %v1171
        %1200 = vmatprep.subr.mxu0 0.0
        %1201 = vmatpush1.msra.mxu0 %v1172
        %1202 = vmatprep.subr.mxu0 0.0
        %1203 = vmatpush1.msra.mxu0 %v1173
        %1204 = vmatprep.subr.mxu0 0.0
        %1205 = vmatpush1.msra.mxu0 %v1174
        %1206 = vmatprep.subr.mxu0 0.0
        %1207 = vmatpush1.msra.mxu0 %v1175
        %1208 = vmatprep.subr.mxu0 0.0
        %1209 = vmatpush1.msra.mxu0 %v1176
        %1210 = vmatprep.subr.mxu0 0.0
        %1211 = vmatpush1.msra.mxu0 %v1177
        %1212 = vmatprep.subr.mxu0 0.0
        %1213 = vmatpush1.msra.mxu0 %v1178
        %1214 = vmatprep.subr.mxu0 0.0
        %1215 = vmatpush1.msra.mxu0 %v1179
        %1216 = vmatprep.subr.mxu0 0.0
        %1217 = vmatpush1.msra.mxu0 %v1180
        %1218 = vmatprep.subr.mxu0 0.0
        %1219 = vmatpush1.msra.mxu0 %v1181
        %1220 = vmatprep.subr.mxu0 0.0
        %1221 = vmatpush1.msra.mxu0 %v1182
        %1222 = vmatprep.subr.mxu0 0.0
        %1223 = vmatpush1.msra.mxu0 0.0
        %1224 = vmatprep.subr.mxu0 0.0
        %1225 = vmatpush1.msra.mxu0 0.0
        %1226 = vmatprep.subr.mxu0 0.0
        %1227 = vmatpush1.msra.mxu0 0.0
        %1228 = vmatprep.subr.mxu0 0.0
        %1229 = vmatpush1.msra.mxu0 0.0
        %1230 = vmatprep.subr.mxu0 0.0
        %1231 = vmatpush1.msra.mxu0 0.0
        %1232 = vmatprep.subr.mxu0 0.0
        %1233 = vmatpush1.msra.mxu0 0.0
        %1234 = vmatprep.subr.mxu0 0.0
        %1235 = vmatpush1.msra.mxu0 0.0
        %1236 = vmatprep.subr.mxu0 0.0
        %1237 = vmatpush1.msra.mxu0 0.0
        %1238 = vmatprep.subr.mxu0 0.0
        %1239 = vmatpush1.msra.mxu0 0.0
        %1240 = vmatprep.subr.mxu0 0.0
        %1241 = vmatpush1.msra.mxu0 0.0
        %1242 = vmatprep.subr.mxu0 0.0
        %1243 = vmatpush1.msra.mxu0 0.0
        %1244 = vmatprep.subr.mxu0 0.0
        %1245 = vmatpush1.msra.mxu0 0.0
        %1246 = vmatprep.subr.mxu0 0.0
        %1247 = vmatpush1.msra.mxu0 0.0
        %1248 = vmatprep.subr.mxu0 0.0
        %1249 = vmatpush1.msra.mxu0 0.0
        %1250 = vmatprep.subr.mxu0 0.0
        %1251 = vmatpush1.msra.mxu0 0.0
        %1252 = vmatprep.subr.mxu0 0.0
        %1253 = vmatpush1.msra.mxu0 0.0
        %1254 = vmatprep.mubr.f32.mxu0 0.0
        %1255 = vmatmul.mubr.f32.gmra.mrb[0].mxu0 %v1135
        %v1256 = vpop.f32.mrb[0].mxu0
        %v1257 = vadd.f32 %v1188, %v1256
        %v1258 = vpop.f32.mrb[0].mxu0
        %1259 = vmatprep.mubr.f32.mxu0 0.0
        %1260 = vmatmul.mubr.f32.gmra.mrb[0].mxu0 %v1136
        %v1261 = vpop.f32.mrb[0].mxu0
        %v1262 = vadd.f32 %v1188, %v1261
        %v1263 = vpop.f32.mrb[0].mxu0
        %1264 = vmatprep.mubr.f32.mxu0 0.0
        %1265 = vmatmul.mubr.f32.gmra.mrb[0].mxu0 %v1137
        %v1266 = vpop.f32.mrb[0].mxu0
        %v1267 = vadd.f32 %v1188, %v1266
        %v1268 = vpop.f32.mrb[0].mxu0
        %1269 = vmatprep.mubr.f32.mxu0 0.0
        %1270 = vmatmul.mubr.f32.gmra.mrb[0].mxu0 %v1138
        %v1271 = vpop.f32.mrb[0].mxu0
        %v1272 = vadd.f32 %v1188, %v1271
        %v1273 = vpop.f32.mrb[0].mxu0
        %1274 = vmatprep.mubr.f32.mxu0 0.0
        %1275 = vmatmul.mubr.f32.gmra.mrb[0].mxu0 %v1139
        %v1276 = vpop.f32.mrb[0].mxu0
        %v1277 = vadd.f32 %v1188, %v1276
        %v1278 = vpop.f32.mrb[0].mxu0
        %1279 = vmatprep.mubr.f32.mxu0 0.0
        %1280 = vmatmul.mubr.f32.gmra.mrb[0].mxu0 %v1140
        %v1281 = vpop.f32.mrb[0].mxu0
        %v1282 = vadd.f32 %v1188, %v1281
        %v1283 = vpop.f32.mrb[0].mxu0
        %1284 = vmatprep.mubr.f32.mxu0 0.0
        %1285 = vmatmul.mubr.f32.gmra.mrb[0].mxu0 %v1141
        %v1286 = vpop.f32.mrb[0].mxu0
        %v1287 = vadd.f32 %v1188, %v1286
        %v1288 = vpop.f32.mrb[0].mxu0
        %1289 = vmatprep.mubr.f32.mxu0 0.0
        %1290 = vmatmul.mubr.f32.gmra.mrb[0].mxu0 %v1142
        %v1291 = vpop.f32.mrb[0].mxu0
        %v1292 = vadd.f32 %v1188, %v1291
        %v1293 = vpop.f32.mrb[0].mxu0
        %1294 = vmatprep.mubr.f32.mxu0 0.0
        %1295 = vmatmul.mubr.f32.gmra.mrb[0].mxu0 %v1143
        %v1296 = vpop.f32.mrb[0].mxu0
        %v1297 = vadd.f32 %v1188, %v1296
        %v1298 = vpop.f32.mrb[0].mxu0
        %1299 = vmatprep.mubr.f32.mxu0 0.0
        %1300 = vmatmul.mubr.f32.gmra.mrb[0].mxu0 %v1144
        %v1301 = vpop.f32.mrb[0].mxu0
        %v1302 = vadd.f32 %v1188, %v1301
        %v1303 = vpop.f32.mrb[0].mxu0
        %1304 = vmatprep.mubr.f32.mxu0 0.0
        %1305 = vmatmul.mubr.f32.gmra.mrb[0].mxu0 %v1145
        %v1306 = vpop.f32.mrb[0].mxu0
        %v1307 = vadd.f32 %v1188, %v1306
        %v1308 = vpop.f32.mrb[0].mxu0
        %1309 = vmatprep.mubr.f32.mxu0 0.0
        %1310 = vmatmul.mubr.f32.gmra.mrb[0].mxu0 %v1146
        %v1311 = vpop.f32.mrb[0].mxu0
        %v1312 = vadd.f32 %v1188, %v1311
        %v1313 = vpop.f32.mrb[0].mxu0
        %1314 = vmatprep.mubr.f32.mxu0 0.0
        %1315 = vmatmul.mubr.f32.gmra.mrb[0].mxu0 %v1147
        %v1316 = vpop.f32.mrb[0].mxu0
        %v1317 = vadd.f32 %v1188, %v1316
        %v1318 = vpop.f32.mrb[0].mxu0
        %1319 = vmatprep.mubr.f32.mxu0 0.0
        %1320 = vmatmul.mubr.f32.gmra.mrb[0].mxu0 %v1148
        %v1321 = vpop.f32.mrb[0].mxu0
        %v1322 = vadd.f32 %v1188, %v1321
        %v1323 = vpop.f32.mrb[0].mxu0
        %1324 = vmatprep.mubr.f32.mxu0 0.0
        %1325 = vmatmul.mubr.f32.gmra.mrb[0].mxu0 %v1149
        %v1326 = vpop.f32.mrb[0].mxu0
        %v1327 = vadd.f32 %v1188, %v1326
        %v1328 = vpop.f32.mrb[0].mxu0
        %1329 = vmatprep.mubr.f32.mxu0 0.0
        %1330 = vmatmul.mubr.f32.gmra.mrb[0].mxu0 %v1150
        %v1331 = vpop.f32.mrb[0].mxu0
        %v1332 = vadd.f32 %v1188, %v1331
        %v1333 = vpop.f32.mrb[0].mxu0
        %1334 = vmatprep.mubr.f32.mxu0 0.0
        %1335 = vmatmul.mubr.f32.gmra.mrb[0].mxu0 %v1151
        %v1336 = vpop.f32.mrb[0].mxu0
        %v1337 = vadd.f32 %v1188, %v1336
        %v1338 = vpop.f32.mrb[0].mxu0
        %1339 = vmatprep.mubr.f32.mxu0 0.0
        %1340 = vmatmul.mubr.f32.gmra.mrb[0].mxu0 %v1152
        %v1341 = vpop.f32.mrb[0].mxu0
        %v1342 = vadd.f32 %v1188, %v1341
        %v1343 = vpop.f32.mrb[0].mxu0
        %1344 = vmatprep.mubr.f32.mxu0 0.0
        %1345 = vmatmul.mubr.f32.gmra.mrb[0].mxu0 %v1153
        %v1346 = vpop.f32.mrb[0].mxu0
        %v1347 = vadd.f32 %v1188, %v1346
        %v1348 = vpop.f32.mrb[0].mxu0
        %1349 = vmatprep.mubr.f32.mxu0 0.0
        %1350 = vmatmul.mubr.f32.gmra.mrb[0].mxu0 %v1154
        %v1351 = vpop.f32.mrb[0].mxu0
        %v1352 = vadd.f32 %v1188, %v1351
        %v1353 = vpop.f32.mrb[0].mxu0
        %1354 = vmatprep.mubr.f32.mxu0 0.0
        %1355 = vmatmul.mubr.f32.gmra.mrb[0].mxu0 %v1155
        %v1356 = vpop.f32.mrb[0].mxu0
        %v1357 = vadd.f32 %v1188, %v1356
        %v1358 = vpop.f32.mrb[0].mxu0
        %1359 = vmatprep.mubr.f32.mxu0 0.0
        %1360 = vmatmul.mubr.f32.gmra.mrb[0].mxu0 %v1156
        %v1361 = vpop.f32.mrb[0].mxu0
        %v1362 = vadd.f32 %v1188, %v1361
        %v1363 = vpop.f32.mrb[0].mxu0
        %1364 = vmatprep.mubr.f32.mxu0 0.0
        %1365 = vmatmul.mubr.f32.gmra.mrb[0].mxu0 %v1157
        %v1366 = vpop.f32.mrb[0].mxu0
        %v1367 = vadd.f32 %v1188, %v1366
        %v1368 = vpop.f32.mrb[0].mxu0
        %1369 = vmatprep.mubr.f32.mxu0 0.0
        %1370 = vmatmul.mubr.f32.gmra.mrb[0].mxu0 %v1158
        %v1371 = vpop.f32.mrb[0].mxu0
        %v1372 = vadd.f32 %v1188, %v1371
        %v1373 = vpop.f32.mrb[0].mxu0
        %1374 = vmatprep.mubr.f32.mxu0 0.0
        %1375 = vmatmul.mubr.f32.gmra.mrb[0].mxu0 %v1159
        %v1376 = vpop.f32.mrb[0].mxu0
        %v1377 = vadd.f32 %v1188, %v1376
        %v1378 = vpop.f32.mrb[0].mxu0
        %1379 = vmatprep.mubr.f32.mxu0 0.0
        %1380 = vmatmul.mubr.f32.gmra.mrb[0].mxu0 %v1160
        %v1381 = vpop.f32.mrb[0].mxu0
        %v1382 = vadd.f32 %v1188, %v1381
        %v1383 = vpop.f32.mrb[0].mxu0
        %1384 = vmatprep.mubr.f32.mxu0 0.0
        %1385 = vmatmul.mubr.f32.gmra.mrb[0].mxu0 %v1161
        %v1386 = vpop.f32.mrb[0].mxu0
        %v1387 = vadd.f32 %v1188, %v1386
        %v1388 = vpop.f32.mrb[0].mxu0
        %1389 = vmatprep.mubr.f32.mxu0 0.0
        %1390 = vmatmul.mubr.f32.gmra.mrb[0].mxu0 %v1162
        %v1391 = vpop.f32.mrb[0].mxu0
        %v1392 = vadd.f32 %v1188, %v1391
        %v1393 = vpop.f32.mrb[0].mxu0
        %1394 = vmatprep.mubr.f32.mxu0 0.0
        %1395 = vmatmul.mubr.f32.gmra.mrb[0].mxu0 %v1163
        %v1396 = vpop.f32.mrb[0].mxu0
        %v1397 = vadd.f32 %v1188, %v1396
        %v1398 = vpop.f32.mrb[0].mxu0
        %1399 = vmatprep.mubr.f32.mxu0 0.0
        %1400 = vmatmul.mubr.f32.gmra.mrb[0].mxu0 %v1164
        %v1401 = vpop.f32.mrb[0].mxu0
        %v1402 = vadd.f32 %v1188, %v1401
        %v1403 = vpop.f32.mrb[0].mxu0
        %1404 = vmatprep.mubr.f32.mxu0 0.0
        %1405 = vmatmul.mubr.f32.gmra.mrb[0].mxu0 %v1165
        %v1406 = vpop.f32.mrb[0].mxu0
        %v1407 = vadd.f32 %v1188, %v1406
        %v1408 = vpop.f32.mrb[0].mxu0
        %1409 = vmatprep.mubr.f32.mxu0 0.0
        %1410 = vmatmul.mubr.f32.gmra.mrb[0].mxu0 %v1166
        %v1411 = vpop.f32.mrb[0].mxu0
        %v1412 = vadd.f32 %v1188, %v1411
        %v1413 = vpop.f32.mrb[0].mxu0
        %1414 = vdwg.mxu0
        %v1415 = vmax.f32 %v1257, 0.0
        %v1416 = vmax.f32 %v1262, 0.0
        %v1417 = vmax.f32 %v1267, 0.0
        %v1418 = vmax.f32 %v1272, 0.0
        %v1419 = vmax.f32 %v1277, 0.0
        %v1420 = vmax.f32 %v1282, 0.0
        %v1421 = vmax.f32 %v1287, 0.0
        %v1422 = vmax.f32 %v1292, 0.0
        %v1423 = vmax.f32 %v1297, 0.0
        %v1424 = vmax.f32 %v1302, 0.0
        %v1425 = vmax.f32 %v1307, 0.0
        %v1426 = vmax.f32 %v1312, 0.0
        %v1427 = vmax.f32 %v1317, 0.0
        %v1428 = vmax.f32 %v1322, 0.0
        %v1429 = vmax.f32 %v1327, 0.0
        %v1430 = vmax.f32 %v1332, 0.0
        %v1431 = vmax.f32 %v1337, 0.0
        %v1432 = vmax.f32 %v1342, 0.0
        %v1433 = vmax.f32 %v1347, 0.0
        %v1434 = vmax.f32 %v1352, 0.0
        %v1435 = vmax.f32 %v1357, 0.0
        %v1436 = vmax.f32 %v1362, 0.0
        %v1437 = vmax.f32 %v1367, 0.0
        %v1438 = vmax.f32 %v1372, 0.0
        %v1439 = vmax.f32 %v1377, 0.0
        %v1440 = vmax.f32 %v1382, 0.0
        %v1441 = vmax.f32 %v1387, 0.0
        %v1442 = vmax.f32 %v1392, 0.0
        %v1443 = vmax.f32 %v1397, 0.0
        %v1444 = vmax.f32 %v1402, 0.0
        %v1445 = vmax.f32 %v1407, 0.0
        %v1446 = vmax.f32 %v1412, 0.0
        %1447 = vst [vmem:[%s505] sm:$0xff] %v1415
        %1448 = vst [vmem:[%s505 + $0x8] sm:$0xff] %v1416
        %1449 = vst [vmem:[%s505 + $0x10] sm:$0xff] %v1417
        %1450 = vst [vmem:[%s505 + $0x18] sm:$0xff] %v1418
        %1451 = vst [vmem:[%s505 + $0x20] sm:$0xff] %v1419
        %1452 = vst [vmem:[%s505 + $0x28] sm:$0xff] %v1420
        %1453 = vst [vmem:[%s505 + $0x30] sm:$0xff] %v1421
        %1454 = vst [vmem:[%s505 + $0x38] sm:$0xff] %v1422
        %1455 = vst [vmem:[%s505 + $0x40] sm:$0xff] %v1423
        %1456 = vst [vmem:[%s505 + $0x48] sm:$0xff] %v1424
        %1457 = vst [vmem:[%s505 + $0x50] sm:$0xff] %v1425
        %1458 = vst [vmem:[%s505 + $0x58] sm:$0xff] %v1426
        %1459 = vst [vmem:[%s505 + $0x60] sm:$0xff] %v1427
        %1460 = vst [vmem:[%s505 + $0x68] sm:$0xff] %v1428
        %1461 = vst [vmem:[%s505 + $0x70] sm:$0xff] %v1429
        %1462 = vst [vmem:[%s505 + $0x78] sm:$0xff] %v1430
        %1463 = vst [vmem:[%s505 + $0x80] sm:$0xff] %v1431
        %1464 = vst [vmem:[%s505 + $0x88] sm:$0xff] %v1432
        %1465 = vst [vmem:[%s505 + $0x90] sm:$0xff] %v1433
        %1466 = vst [vmem:[%s505 + $0x98] sm:$0xff] %v1434
        %1467 = vst [vmem:[%s505 + $0xa0] sm:$0xff] %v1435
        %1468 = vst [vmem:[%s505 + $0xa8] sm:$0xff] %v1436
        %1469 = vst [vmem:[%s505 + $0xb0] sm:$0xff] %v1437
        %1470 = vst [vmem:[%s505 + $0xb8] sm:$0xff] %v1438
        %1471 = vst [vmem:[%s505 + $0xc0] sm:$0xff] %v1439
        %1472 = vst [vmem:[%s505 + $0xc8] sm:$0xff] %v1440
        %1473 = vst [vmem:[%s505 + $0xd0] sm:$0xff] %v1441
        %1474 = vst [vmem:[%s505 + $0xd8] sm:$0xff] %v1442
        %1475 = vst [vmem:[%s505 + $0xe0] sm:$0xff] %v1443
        %1476 = vst [vmem:[%s505 + $0xe8] sm:$0xff] %v1444
        %1477 = vst [vmem:[%s505 + $0xf0] sm:$0xff] %v1445
        %1478 = vst [vmem:[%s505 + $0xf8] sm:$0xff] %v1446
        %v1479 = vlaneseq
        %v1480 = vshrl.u32 %v1479, 7
        %v1481 = vadd.s32 %v1480, 8
        %v1482 = vadd.s32 %v1480, 16
        %v1483 = vadd.s32 %v1480, 24
        %v1484 = vadd.s32 %v1480, 32
        %v1485 = vadd.s32 %v1480, 40
        %v1486 = vadd.s32 %v1480, 48
        %v1487 = vadd.s32 %v1480, 56
        %v1488 = vld [vmem:[%s419] sm:$0x3]
        %v1489 = vlaneseq
        %v1490 = vshrl.u32 %v1489, 7
        %v1491 = vsub.s32 0, %v1490
        %v1492 = vrot.slane %v1488, %v1491
        %v1493 = vlaneseq
        %v1494 = vshrl.u32 %v1493, 7
        %v1495 = vsub.s32 1, %v1494
        %v1496 = vrot.slane %v1488, %v1495
        %vm1497 = vcmp.eq.s32.totalorder %v1480, %v1492
        %vm1498 = vcmp.eq.s32.totalorder %v1480, %v1496
        %vm1499 = vcmp.eq.s32.totalorder %v1481, %v1492
        %vm1500 = vcmp.eq.s32.totalorder %v1481, %v1496
        %vm1501 = vcmp.eq.s32.totalorder %v1482, %v1492
        %vm1502 = vcmp.eq.s32.totalorder %v1482, %v1496
        %vm1503 = vcmp.eq.s32.totalorder %v1483, %v1492
        %vm1504 = vcmp.eq.s32.totalorder %v1483, %v1496
        %vm1505 = vcmp.eq.s32.totalorder %v1484, %v1492
        %vm1506 = vcmp.eq.s32.totalorder %v1484, %v1496
        %vm1507 = vcmp.eq.s32.totalorder %v1485, %v1492
        %vm1508 = vcmp.eq.s32.totalorder %v1485, %v1496
        %vm1509 = vcmp.eq.s32.totalorder %v1486, %v1492
        %vm1510 = vcmp.eq.s32.totalorder %v1486, %v1496
        %vm1511 = vcmp.eq.s32.totalorder %v1487, %v1492
        %vm1512 = vcmp.eq.s32.totalorder %v1487, %v1496
        %v1513 = vsel %vm1497, 1, 0
        %v1514 = vsel %vm1498, 1, 0
        %v1515 = vsel %vm1499, 1, 0
        %v1516 = vsel %vm1500, 1, 0
        %v1517 = vsel %vm1501, 1, 0
        %v1518 = vsel %vm1502, 1, 0
        %v1519 = vsel %vm1503, 1, 0
        %v1520 = vsel %vm1504, 1, 0
        %v1521 = vsel %vm1505, 1, 0
        %v1522 = vsel %vm1506, 1, 0
        %v1523 = vsel %vm1507, 1, 0
        %v1524 = vsel %vm1508, 1, 0
        %v1525 = vsel %vm1509, 1, 0
        %v1526 = vsel %vm1510, 1, 0
        %v1527 = vsel %vm1511, 1, 0
        %v1528 = vsel %vm1512, 1, 0
        %v1529 = vcvt.s32.f32 %v1513
        %v1530 = vcvt.s32.f32 %v1514
        %v1531 = vcvt.s32.f32 %v1515
        %v1532 = vcvt.s32.f32 %v1516
        %v1533 = vcvt.s32.f32 %v1517
        %v1534 = vcvt.s32.f32 %v1518
        %v1535 = vcvt.s32.f32 %v1519
        %v1536 = vcvt.s32.f32 %v1520
        %v1537 = vcvt.s32.f32 %v1521
        %v1538 = vcvt.s32.f32 %v1522
        %v1539 = vcvt.s32.f32 %v1523
        %v1540 = vcvt.s32.f32 %v1524
        %v1541 = vcvt.s32.f32 %v1525
        %v1542 = vcvt.s32.f32 %v1526
        %v1543 = vcvt.s32.f32 %v1527
        %v1544 = vcvt.s32.f32 %v1528
        %v1545 = vld [vmem:[#allocation15] sm:$0xff]
        %v1546 = vld [vmem:[#allocation15 + $0x8] sm:$0xff]
        %v1547 = vld [vmem:[#allocation15 + $0x10] sm:$0xff]
        %v1548 = vld [vmem:[#allocation15 + $0x18] sm:$0xff]
        %v1549 = vld [vmem:[#allocation15 + $0x20] sm:$0xff]
        %v1550 = vld [vmem:[#allocation15 + $0x28] sm:$0xff]
        %v1551 = vld [vmem:[#allocation15 + $0x30] sm:$0xff]
        %v1552 = vld [vmem:[#allocation15 + $0x38] sm:$0xff]
        %1553 = vmatprep.subr.mxu0 0.0
        %1554 = vmatpush1.msra.mxu0 %v1415
        %1555 = vmatprep.subr.mxu0 0.0
        %1556 = vmatpush1.msra.mxu0 %v1416
        %1557 = vmatprep.subr.mxu0 0.0
        %1558 = vmatpush1.msra.mxu0 %v1417
        %1559 = vmatprep.subr.mxu0 0.0
        %1560 = vmatpush1.msra.mxu0 %v1418
        %1561 = vmatprep.subr.mxu0 0.0
        %1562 = vmatpush1.msra.mxu0 %v1419
        %1563 = vmatprep.subr.mxu0 0.0
        %1564 = vmatpush1.msra.mxu0 %v1420
        %1565 = vmatprep.subr.mxu0 0.0
        %1566 = vmatpush1.msra.mxu0 %v1421
        %1567 = vmatprep.subr.mxu0 0.0
        %1568 = vmatpush1.msra.mxu0 %v1422
        %1569 = vmatprep.subr.mxu0 0.0
        %1570 = vmatpush1.msra.mxu0 %v1423
        %1571 = vmatprep.subr.mxu0 0.0
        %1572 = vmatpush1.msra.mxu0 %v1424
        %1573 = vmatprep.subr.mxu0 0.0
        %1574 = vmatpush1.msra.mxu0 %v1425
        %1575 = vmatprep.subr.mxu0 0.0
        %1576 = vmatpush1.msra.mxu0 %v1426
        %1577 = vmatprep.subr.mxu0 0.0
        %1578 = vmatpush1.msra.mxu0 %v1427
        %1579 = vmatprep.subr.mxu0 0.0
        %1580 = vmatpush1.msra.mxu0 %v1428
        %1581 = vmatprep.subr.mxu0 0.0
        %1582 = vmatpush1.msra.mxu0 %v1429
        %1583 = vmatprep.subr.mxu0 0.0
        %1584 = vmatpush1.msra.mxu0 %v1430
        %1585 = vmatprep.subr.mxu0 0.0
        %1586 = vmatpush1.msra.mxu0 %v1431
        %1587 = vmatprep.subr.mxu0 0.0
        %1588 = vmatpush1.msra.mxu0 %v1432
        %1589 = vmatprep.subr.mxu0 0.0
        %1590 = vmatpush1.msra.mxu0 %v1433
        %1591 = vmatprep.subr.mxu0 0.0
        %1592 = vmatpush1.msra.mxu0 %v1434
        %1593 = vmatprep.subr.mxu0 0.0
        %1594 = vmatpush1.msra.mxu0 %v1435
        %1595 = vmatprep.subr.mxu0 0.0
        %1596 = vmatpush1.msra.mxu0 %v1436
        %1597 = vmatprep.subr.mxu0 0.0
        %1598 = vmatpush1.msra.mxu0 %v1437
        %1599 = vmatprep.subr.mxu0 0.0
        %1600 = vmatpush1.msra.mxu0 %v1438
        %1601 = vmatprep.subr.mxu0 0.0
        %1602 = vmatpush1.msra.mxu0 %v1439
        %1603 = vmatprep.subr.mxu0 0.0
        %1604 = vmatpush1.msra.mxu0 %v1440
        %1605 = vmatprep.subr.mxu0 0.0
        %1606 = vmatpush1.msra.mxu0 %v1441
        %1607 = vmatprep.subr.mxu0 0.0
        %1608 = vmatpush1.msra.mxu0 %v1442
        %1609 = vmatprep.subr.mxu0 0.0
        %1610 = vmatpush1.msra.mxu0 %v1443
        %1611 = vmatprep.subr.mxu0 0.0
        %1612 = vmatpush1.msra.mxu0 %v1444
        %1613 = vmatprep.subr.mxu0 0.0
        %1614 = vmatpush1.msra.mxu0 %v1445
        %1615 = vmatprep.subr.mxu0 0.0
        %1616 = vmatpush1.msra.mxu0 %v1446
        %1617 = vmatprep.mubr.f32.mxu0 %v1530
        %1618 = vmatmul.mubr.f32.gmra.mrb[0].mxu0 %v1529
        %v1619 = vpop.f32.mrb[0].mxu0
        %v1620 = vadd.f32 0.0, %v1619
        %v1621 = vpop.f32.mrb[0].mxu0
        %1622 = vmatprep.mubr.f32.mxu0 %v1532
        %1623 = vmatmul.mubr.f32.gmra.mrb[0].mxu0 %v1531
        %v1624 = vpop.f32.mrb[0].mxu0
        %v1625 = vadd.f32 0.0, %v1624
        %v1626 = vpop.f32.mrb[0].mxu0
        %1627 = vmatprep.mubr.f32.mxu0 %v1534
        %1628 = vmatmul.mubr.f32.gmra.mrb[0].mxu0 %v1533
        %v1629 = vpop.f32.mrb[0].mxu0
        %v1630 = vadd.f32 0.0, %v1629
        %v1631 = vpop.f32.mrb[0].mxu0
        %1632 = vmatprep.mubr.f32.mxu0 %v1536
        %1633 = vmatmul.mubr.f32.gmra.mrb[0].mxu0 %v1535
        %v1634 = vpop.f32.mrb[0].mxu0
        %v1635 = vadd.f32 0.0, %v1634
        %v1636 = vpop.f32.mrb[0].mxu0
        %1637 = vmatprep.mubr.f32.mxu0 %v1538
        %1638 = vmatmul.mubr.f32.gmra.mrb[0].mxu0 %v1537
        %v1639 = vpop.f32.mrb[0].mxu0
        %v1640 = vadd.f32 0.0, %v1639
        %v1641 = vpop.f32.mrb[0].mxu0
        %1642 = vmatprep.mubr.f32.mxu0 %v1540
        %1643 = vmatmul.mubr.f32.gmra.mrb[0].mxu0 %v1539
        %v1644 = vpop.f32.mrb[0].mxu0
        %v1645 = vadd.f32 0.0, %v1644
        %v1646 = vpop.f32.mrb[0].mxu0
        %1647 = vmatprep.mubr.f32.mxu0 %v1542
        %1648 = vmatmul.mubr.f32.gmra.mrb[0].mxu0 %v1541
        %v1649 = vpop.f32.mrb[0].mxu0
        %v1650 = vadd.f32 0.0, %v1649
        %v1651 = vpop.f32.mrb[0].mxu0
        %1652 = vmatprep.mubr.f32.mxu0 %v1544
        %1653 = vmatmul.mubr.f32.gmra.mrb[0].mxu0 %v1543
        %v1654 = vpop.f32.mrb[0].mxu0
        %v1655 = vadd.f32 0.0, %v1654
        %v1656 = vpop.f32.mrb[0].mxu0
        %1657 = vdwg.mxu0
        %v1658 = vadd.f32 %v1545, %v1620
        %v1659 = vadd.f32 %v1546, %v1625
        %v1660 = vadd.f32 %v1547, %v1630
        %v1661 = vadd.f32 %v1548, %v1635
        %v1662 = vadd.f32 %v1549, %v1640
        %v1663 = vadd.f32 %v1550, %v1645
        %v1664 = vadd.f32 %v1551, %v1650
        %v1665 = vadd.f32 %v1552, %v1655
        %1666 = vst [vmem:[#allocation15] sm:$0xff] %v1658
        %1667 = vst [vmem:[#allocation15 + $0x8] sm:$0xff] %v1659
        %1668 = vst [vmem:[#allocation15 + $0x10] sm:$0xff] %v1660
        %1669 = vst [vmem:[#allocation15 + $0x18] sm:$0xff] %v1661
        %1670 = vst [vmem:[#allocation15 + $0x20] sm:$0xff] %v1662
        %1671 = vst [vmem:[#allocation15 + $0x28] sm:$0xff] %v1663
        %1672 = vst [vmem:[#allocation15 + $0x30] sm:$0xff] %v1664
        %1673 = vst [vmem:[#allocation15 + $0x38] sm:$0xff] %v1665
        %s1674 = sand.u32 %s231, 1
        %s1675 = scalar_lea.sflag [#allocation4], %s1674
        %s1676 = sand.u32 %s231, 1
        %s1677 = smul.addr %s1676, 256
        %s1678 = scalar_lea.vmem [#allocation14], %s1677
        // Predicated region
        $region85: #{tpu_custom_call.1} parent=51 // pred_check
          %p1679 = pneg %p241
        $region86: #{tpu_custom_call.1} parent=51 // pred_check_branch
          %1681 = sbr.rel (%p1679) target = $region88
        $region87: #{tpu_custom_call.1} parent=51 // pred_region
          %s1682 = smul.u32 32, %s35
          %s1684 = ssub.s32 4096, 4096
          %1685 = vsyncadd %s1675, %s1684
          %s1686 = smul.addr %s1682, 128
          %s1687 = scalar_lea.hbm %s8, %s1686
          %s1688 = sshll.u32 %s1678, 4
          %s1689 = int_to_ptr.vmem [resolvable:$true] %s1688
          %1694 = dma.vmem_to_hbm [thread:$0]  %s1689, 4096, %s1687, %s1675, 128, 128, 8
        $region88: #{tpu_custom_call.1} parent=51 // pred_fallthru
          _
        // Predicated region
        $region89: #{tpu_custom_call.1} parent=51 // pred_check
          %p1695 = pneg %p262
        $region90: #{tpu_custom_call.1} parent=51 // pred_check_branch
          %1697 = sbr.rel (%p1695) target = $region92
        $region91: #{tpu_custom_call.1} parent=51 // pred_region
          %s1699 = ssub.s32 1024, 1024
          %1700 = vsyncadd [#allocation16], %s1699
          %s1701 = sshll.u32 [#allocation15], 4
          %s1702 = int_to_ptr.vmem [resolvable:$true] %s1701
          %1707 = dma.vmem_to_hbm [thread:$0]  %s1702, 1024, %s9, [#allocation16], 128, 128, 8
        $region92: #{tpu_custom_call.1} parent=51 // pred_fallthru
          _
        // Predicated region
        $region93: #{tpu_custom_call.1} parent=51 // pred_check
          %p1708 = pneg %p262
        $region94: #{tpu_custom_call.1} parent=51 // pred_check_branch
          %1710 = sbr.rel (%p1708) target = $region96
        $region95: #{tpu_custom_call.1} parent=51 // pred_region
          %1711 = dma.done [#allocation16], 1024
        $region96: #{tpu_custom_call.1} parent=51 // pred_fallthru
          _
      $region52: #{tpu_custom_call.1} parent=5 // pred_fallthru
        _
      %p1712 = scmp.le.s32.totalorder 2, %s30
      // Predicated region
      $region97: #{tpu_custom_call.1} parent=5 // pred_check
        %p1713 = pneg %p1712
      $region98: #{tpu_custom_call.1} parent=5 // pred_check_branch
        %1715 = sbr.rel (%p1713) target = $region100
      $region99: #{tpu_custom_call.1} parent=5 // pred_region
        %s1716 = ssub.s32 %s30, 2
        // Predicated region
        $region101: #{tpu_custom_call.1} parent=99 // pred_check
          %p1717 = pneg %p247
        $region102: #{tpu_custom_call.1} parent=99 // pred_check_branch
          %1719 = sbr.rel (%p1717) target = $region104
        $region103: #{tpu_custom_call.1} parent=99 // pred_region
          %s1720 = sand.u32 %s232, 1
          %s1721 = scalar_lea.sflag [#allocation4], %s1720
          %s1722 = sand.u32 %s232, 1
          %s1723 = smul.addr %s1722, 256
          %s1724 = scalar_lea.vmem [#allocation14], %s1723
          %1725 = dma.done %s1721, 4096
        $region104: #{tpu_custom_call.1} parent=99 // pred_fallthru
          _
      $region100: #{tpu_custom_call.1} parent=5 // pred_fallthru
        _
    $region6: #{tpu_custom_call.1} parent=1 // loop_footer
      %s34 = sadd.s32 1, %s30
    $region7: #{tpu_custom_call.1} parent=1 // loop_footer_branch
      %29 = sbr.rel target = $region3
    $region8: #{tpu_custom_call.1} parent=1 // loop_exit
      _
    %1726 = vsyncpa [#allocation3], 1
    %s1727 = scalar_lea.sflag [#allocation3], 1
    %1728 = vsyncpa %s1727, 1
    %1729 = vsyncpa [#allocation6], 1
    %s1730 = scalar_lea.sflag [#allocation6], 1
    %1731 = vsyncpa %s1730, 1
    %1732 = vsyncpa [#allocation9], 1
    %s1733 = scalar_lea.sflag [#allocation9], 1
    %1734 = vsyncpa %s1733, 1
    %1735 = vsyncpa [#allocation12], 1
    %1736 = vsyncpa [#allocation4], 1
    %s1737 = scalar_lea.sflag [#allocation4], 1
    %1738 = vsyncpa %s1737, 1
    %1739 = vsyncpa [#allocation16], 1

</llo_original>
